<compile_context>
chip_gen: v6e
topology: v6e:2x2x1
jax: 0.10.0
libtpu: 0.0.40
codegen_flags: <defaults>
</compile_context>

<pallas_src>
import math
import functools

import jax
import jax.numpy as jnp
from jax import lax
from jax.experimental import pallas as pl
from jax.experimental.pallas import tpu as pltpu

# TODO(synk): `dropout_p` is undefined in the original PyTorch file (that is why
# it jit-fails); dropout is therefore treated as identity (p = 0.0).
DROPOUT_P = 0.0

_NEG_LARGE = -1e30  # finite "-inf" so online-softmax rescaling never NaNs


def _flash_sdpa_kernel(q_ref, k_ref, v_ref, o_ref,
                       m_sc, l_sc, acc_sc,
                       *, inv_scale, skv, tkv, needs_kv_mask):
    kv_i = pl.program_id(2)

    @pl.when(kv_i == 0)
    def _init():
        m_sc[...] = jnp.full(m_sc.shape, _NEG_LARGE, dtype=m_sc.dtype)
        l_sc[...] = jnp.zeros(l_sc.shape, dtype=l_sc.dtype)
        acc_sc[...] = jnp.zeros(acc_sc.shape, dtype=acc_sc.dtype)

    # Scale q (tq x D elements) instead of the (tq x tkv) score matrix.
    q = q_ref[0] * inv_scale          # (tq, D)
    k = k_ref[0]                      # (tkv, D)
    v = v_ref[0]                      # (tkv, D)

    # q @ k^T without an explicit transpose: contract q dim 1 with k dim 1.
    s = lax.dot_general(q, k, (((1,), (1,)), ((), ())),
                        preferred_element_type=jnp.float32)  # (tq, tkv)

    if needs_kv_mask:
        kv_pos = kv_i * tkv + lax.broadcasted_iota(jnp.int32, s.shape, 1)
        valid = kv_pos < skv
        s = jnp.where(valid, s, _NEG_LARGE)

    # Online softmax update.
    m_prev = m_sc[...]                                          # (tq, 1)
    m_new = jnp.maximum(m_prev, jnp.max(s, axis=-1, keepdims=True))
    alpha = jnp.exp(m_prev - m_new)
    p = jnp.exp(s - m_new)
    if needs_kv_mask:
        p = jnp.where(valid, p, 0.0)

    l_sc[...] = alpha * l_sc[...] + jnp.sum(p, axis=-1, keepdims=True)
    acc_sc[...] = alpha * acc_sc[...] + jnp.dot(
        p.astype(v.dtype), v, preferred_element_type=jnp.float32)
    m_sc[...] = m_new

    @pl.when(kv_i == pl.num_programs(2) - 1)
    def _finalize():
        inv_l = pl.reciprocal(l_sc[...], approx=True)
        o_ref[0] = (acc_sc[...] * inv_l).astype(o_ref.dtype)


def _round_up(x, m):
    return ((x + m - 1) // m) * m


def sdpa(q, k, v, dropout_p=DROPOUT_P):
    """Scaled-dot-product attention matching the PyTorch Model.forward."""
    assert dropout_p == 0.0  # identity dropout (dropout_p undefined in source)
    B, Sq, D = q.shape
    _, Skv, _ = k.shape
    assert k.shape == (B, Skv, D)
    assert v.shape == (B, Skv, D)

    # Tile sizes: at least one MXU height of query rows; larger kv tiles when
    # the key/value sequence is long enough to amortize per-grid-step overhead.
    tq = 256 if Sq >= 256 else 128
    tkv = 512 if Skv >= 512 else 128

    sq_pad = _round_up(Sq, tq)
    skv_pad = _round_up(Skv, tkv)

    if sq_pad != Sq:
        q = jnp.pad(q, ((0, 0), (0, sq_pad - Sq), (0, 0)))
    if skv_pad != Skv:
        k = jnp.pad(k, ((0, 0), (0, skv_pad - Skv), (0, 0)))
        v = jnp.pad(v, ((0, 0), (0, skv_pad - Skv), (0, 0)))

    kernel = functools.partial(
        _flash_sdpa_kernel,
        inv_scale=1.0 / math.sqrt(D),
        skv=Skv,
        tkv=tkv,
        needs_kv_mask=(skv_pad != Skv),
    )

    out = pl.pallas_call(
        kernel,
        out_shape=jax.ShapeDtypeStruct((B, sq_pad, D), q.dtype),
        grid_spec=pltpu.PrefetchScalarGridSpec(
            num_scalar_prefetch=0,
            grid=(B, sq_pad // tq, skv_pad // tkv),
            in_specs=[
                pl.BlockSpec((1, tq, D), lambda b, qi, ki: (b, qi, 0)),
                pl.BlockSpec((1, tkv, D), lambda b, qi, ki: (b, ki, 0)),
                pl.BlockSpec((1, tkv, D), lambda b, qi, ki: (b, ki, 0)),
            ],
            out_specs=pl.BlockSpec((1, tq, D), lambda b, qi, ki: (b, qi, 0)),
            scratch_shapes=[
                pltpu.VMEM((tq, 1), jnp.float32),   # running max   m
                pltpu.VMEM((tq, 1), jnp.float32),   # running denom l
                pltpu.VMEM((tq, D), jnp.float32),   # output accumulator
            ],
        ),
        compiler_params=pltpu.CompilerParams(
            dimension_semantics=("parallel", "parallel", "arbitrary"),
            vmem_limit_bytes=32 * 1024 * 1024,
        ),
    )(q, k, v)

    return out[:, :Sq, :] if sq_pad != Sq else out


def sdpa_reference(q, k, v):
    # Pure-JAX reference (dropout_p == 0 path).
    d = q.shape[-1]
    s = jnp.einsum("bqd,bkd->bqk", q, k) / math.sqrt(d)
    p = jax.nn.softmax(s, axis=-1)
    return jnp.einsum("bqk,bkd->bqd", p, v)


if __name__ == "__main__":
    # Small shapes consistent with the module's (batch, seq, dim) 3-D matmuls.
    B, Sq, Skv, D = 2, 8, 8, 128
    key = jax.random.PRNGKey(0)
    kq, kk, kv = jax.random.split(key, 3)
    q = jax.random.normal(kq, (B, Sq, D), dtype=jnp.float32)
    k = jax.random.normal(kk, (B, Skv, D), dtype=jnp.float32)
    v = jax.random.normal(kv, (B, Skv, D), dtype=jnp.float32)

    out = sdpa(q, k, v)
    out = jax.block_until_ready(out)

    ref = sdpa_reference(q, k, v)
    assert out.shape == (B, Sq, D)
    # slightly loose tolerance: approx reciprocal on the EUP in the finalize
    assert jnp.allclose(out, ref, atol=2e-3, rtol=2e-3), "mismatch vs reference"

    print("KERNEL_OK")
</pallas_src>

<mosaic_0001>
module attributes {stable_mosaic.version = 11 : i64} {
  func.func @_flash_sdpa_kernel(%arg0: i32, %arg1: i32, %arg2: i32, %arg3: memref<1x128x128xf32, #tpu.memory_space<vmem>>, %arg4: memref<1x128x128xf32, #tpu.memory_space<vmem>>, %arg5: memref<1x128x128xf32, #tpu.memory_space<vmem>>, %arg6: memref<1x128x128xf32, #tpu.memory_space<vmem>>, %arg7: memref<128x1xf32, #tpu.memory_space<vmem>>, %arg8: memref<128x1xf32, #tpu.memory_space<vmem>>, %arg9: memref<128x128xf32, #tpu.memory_space<vmem>>) attributes {dimension_semantics = [#tpu.dimension_semantics<parallel>, #tpu.dimension_semantics<parallel>, #tpu.dimension_semantics<arbitrary>], iteration_bounds = array<i64: 2, 1, 1>, scalar_prefetch = 0 : i64, scratch_operands = 3 : i64, tpu.core_type = #tpu.core_type<tc>, window_params = [{transform_indices = @transform_0, window_bounds = array<i64: 1, 128, 128>}, {transform_indices = @transform_1, window_bounds = array<i64: 1, 128, 128>}, {transform_indices = @transform_2, window_bounds = array<i64: 1, 128, 128>}, {transform_indices = @transform_3, window_bounds = array<i64: 1, 128, 128>}]} {
    %c0_i32 = arith.constant 0 : i32
    %0 = arith.cmpi eq, %arg2, %c0_i32 : i32
    %1 = arith.extui %0 : i1 to i32
    %c0_i32_0 = arith.constant 0 : i32
    %2 = arith.cmpi ne, %1, %c0_i32_0 : i32
    scf.if %2 {
      %cst_29 = arith.constant -1.000000e+30 : f32
      %47 = vector.broadcast %cst_29 : f32 to vector<128x1xf32>
      %c0_30 = arith.constant 0 : index
      %c0_31 = arith.constant 0 : index
      %48 = vector.load %arg7[%c0_30, %c0_31] : memref<128x1xf32, #tpu.memory_space<vmem>>, vector<128x1xf32>
      tpu.vector_store %arg7[%c0_30, %c0_31], %47 {strides = array<i32>} : memref<128x1xf32, #tpu.memory_space<vmem>>, vector<128x1xf32>,
      %cst_32 = arith.constant 0.000000e+00 : f32
      %49 = vector.broadcast %cst_32 : f32 to vector<128x1xf32>
      %c0_33 = arith.constant 0 : index
      %c0_34 = arith.constant 0 : index
      %50 = vector.load %arg8[%c0_33, %c0_34] : memref<128x1xf32, #tpu.memory_space<vmem>>, vector<128x1xf32>
      tpu.vector_store %arg8[%c0_33, %c0_34], %49 {strides = array<i32>} : memref<128x1xf32, #tpu.memory_space<vmem>>, vector<128x1xf32>,
      %cst_35 = arith.constant 0.000000e+00 : f32
      %51 = vector.broadcast %cst_35 : f32 to vector<128x128xf32>
      %c0_36 = arith.constant 0 : index
      %c0_37 = arith.constant 0 : index
      %52 = vector.load %arg9[%c0_36, %c0_37] : memref<128x128xf32, #tpu.memory_space<vmem>>, vector<128x128xf32>
      tpu.vector_store %arg9[%c0_36, %c0_37], %51 {strides = array<i32>} : memref<128x128xf32, #tpu.memory_space<vmem>>, vector<128x128xf32>,
    } else {
    }
    %c0 = arith.constant 0 : index
    %c0_1 = arith.constant 0 : index
    %c0_2 = arith.constant 0 : index
    %3 = vector.load %arg3[%c0, %c0_1, %c0_2] : memref<1x128x128xf32, #tpu.memory_space<vmem>>, vector<1x128x128xf32>
    %4 = vector.shape_cast %3 : vector<1x128x128xf32> to vector<128x128xf32>
    %cst = arith.constant 0.0883883461 : f32
    %5 = vector.broadcast %cst : f32 to vector<128x128xf32>
    %6 = arith.mulf %4, %5 : vector<128x128xf32>
    %c0_3 = arith.constant 0 : index
    %c0_4 = arith.constant 0 : index
    %c0_5 = arith.constant 0 : index
    %7 = vector.load %arg4[%c0_3, %c0_4, %c0_5] : memref<1x128x128xf32, #tpu.memory_space<vmem>>, vector<1x128x128xf32>
    %8 = vector.shape_cast %7 : vector<1x128x128xf32> to vector<128x128xf32>
    %c0_6 = arith.constant 0 : index
    %c0_7 = arith.constant 0 : index
    %c0_8 = arith.constant 0 : index
    %9 = vector.load %arg5[%c0_6, %c0_7, %c0_8] : memref<1x128x128xf32, #tpu.memory_space<vmem>>, vector<1x128x128xf32>
    %10 = vector.shape_cast %9 : vector<1x128x128xf32> to vector<128x128xf32>
    %cst_9 = arith.constant dense<0.000000e+00> : vector<128x128xf32>
    %11 = tpu.matmul %6, %8, %cst_9 {dimension_numbers = #tpu.dot_dimension_numbers<[1], [1], [0], [0], [0, 0, 1, 0], [], []>} : vector<128x128xf32>, vector<128x128xf32>, vector<128x128xf32> -> vector<128x128xf32>
    %c128_i32 = arith.constant 128 : i32
    %12 = arith.muli %arg2, %c128_i32 : i32
    %13 = tpu.iota {dimensions = array<i32: 1>} : vector<128x128xi32>
    %14 = vector.broadcast %12 : i32 to vector<128x128xi32>
    %15 = arith.addi %14, %13 : vector<128x128xi32>
    %c8_i32 = arith.constant 8 : i32
    %16 = vector.broadcast %c8_i32 : i32 to vector<128x128xi32>
    %17 = arith.cmpi slt, %15, %16 : vector<128x128xi32>
    %cst_10 = arith.constant -1.000000e+30 : f32
    %18 = vector.broadcast %cst_10 : f32 to vector<128x128xf32>
    %19 = arith.select %17, %11, %18 : vector<128x128xi1>, vector<128x128xf32>
    %c0_11 = arith.constant 0 : index
    %c0_12 = arith.constant 0 : index
    %20 = vector.load %arg7[%c0_11, %c0_12] : memref<128x1xf32, #tpu.memory_space<vmem>>, vector<128x1xf32>
    %cst_13 = arith.constant dense<0xFF800000> : vector<128xf32>
    %21 = vector.multi_reduction <maximumf>, %19, %cst_13 [1] : vector<128x128xf32> to vector<128xf32>
    %22 = vector.shape_cast %21 : vector<128xf32> to vector<128x1xf32>
    %23 = arith.maximumf %20, %22 : vector<128x1xf32>
    %24 = arith.subf %20, %23 : vector<128x1xf32>
    %25 = math.exp %24 : vector<128x1xf32>
    %26 = vector.broadcast %23 : vector<128x1xf32> to vector<128x128xf32>
    %27 = arith.subf %19, %26 : vector<128x128xf32>
    %28 = math.exp %27 : vector<128x128xf32>
    %cst_14 = arith.constant 0.000000e+00 : f32
    %29 = vector.broadcast %cst_14 : f32 to vector<128x128xf32>
    %30 = arith.select %17, %28, %29 : vector<128x128xi1>, vector<128x128xf32>
    %c0_15 = arith.constant 0 : index
    %c0_16 = arith.constant 0 : index
    %31 = vector.load %arg8[%c0_15, %c0_16] : memref<128x1xf32, #tpu.memory_space<vmem>>, vector<128x1xf32>
    %32 = arith.mulf %25, %31 : vector<128x1xf32>
    %cst_17 = arith.constant dense<0.000000e+00> : vector<128xf32>
    %33 = vector.multi_reduction <add>, %30, %cst_17 [1] : vector<128x128xf32> to vector<128xf32>
    %34 = vector.shape_cast %33 : vector<128xf32> to vector<128x1xf32>
    %35 = arith.addf %32, %34 : vector<128x1xf32>
    %c0_18 = arith.constant 0 : index
    %c0_19 = arith.constant 0 : index
    %36 = vector.load %arg8[%c0_18, %c0_19] : memref<128x1xf32, #tpu.memory_space<vmem>>, vector<128x1xf32>
    tpu.vector_store %arg8[%c0_18, %c0_19], %35 {strides = array<i32>} : memref<128x1xf32, #tpu.memory_space<vmem>>, vector<128x1xf32>,
    %c0_20 = arith.constant 0 : index
    %c0_21 = arith.constant 0 : index
    %37 = vector.load %arg9[%c0_20, %c0_21] : memref<128x128xf32, #tpu.memory_space<vmem>>, vector<128x128xf32>
    %38 = vector.broadcast %25 : vector<128x1xf32> to vector<128x128xf32>
    %39 = arith.mulf %38, %37 : vector<128x128xf32>
    %cst_22 = arith.constant dense<0.000000e+00> : vector<128x128xf32>
    %40 = tpu.matmul %30, %10, %cst_22 {dimension_numbers = #tpu.dot_dimension_numbers<[1], [0], [0], [1], [0, 0, 1, 1], [], []>} : vector<128x128xf32>, vector<128x128xf32>, vector<128x128xf32> -> vector<128x128xf32>
    %41 = arith.addf %39, %40 : vector<128x128xf32>
    %c0_23 = arith.constant 0 : index
    %c0_24 = arith.constant 0 : index
    %42 = vector.load %arg9[%c0_23, %c0_24] : memref<128x128xf32, #tpu.memory_space<vmem>>, vector<128x128xf32>
    tpu.vector_store %arg9[%c0_23, %c0_24], %41 {strides = array<i32>} : memref<128x128xf32, #tpu.memory_space<vmem>>, vector<128x128xf32>,
    %c0_25 = arith.constant 0 : index
    %c0_26 = arith.constant 0 : index
    %43 = vector.load %arg7[%c0_25, %c0_26] : memref<128x1xf32, #tpu.memory_space<vmem>>, vector<128x1xf32>
    tpu.vector_store %arg7[%c0_25, %c0_26], %23 {strides = array<i32>} : memref<128x1xf32, #tpu.memory_space<vmem>>, vector<128x1xf32>,
    %c0_i32_27 = arith.constant 0 : i32
    %44 = arith.cmpi eq, %arg2, %c0_i32_27 : i32
    %45 = arith.extui %44 : i1 to i32
    %c0_i32_28 = arith.constant 0 : i32
    %46 = arith.cmpi ne, %45, %c0_i32_28 : i32
    scf.if %46 {
      %c0_29 = arith.constant 0 : index
      %c0_30 = arith.constant 0 : index
      %47 = vector.load %arg8[%c0_29, %c0_30] : memref<128x1xf32, #tpu.memory_space<vmem>>, vector<128x1xf32>
      %48 = tpu.reciprocal %47 {approx = true} : vector<128x1xf32> -> vector<128x1xf32>
      %c0_31 = arith.constant 0 : index
      %c0_32 = arith.constant 0 : index
      %49 = vector.load %arg9[%c0_31, %c0_32] : memref<128x128xf32, #tpu.memory_space<vmem>>, vector<128x128xf32>
      %50 = vector.broadcast %48 : vector<128x1xf32> to vector<128x128xf32>
      %51 = arith.mulf %49, %50 : vector<128x128xf32>
      %c0_33 = arith.constant 0 : index
      %c0_34 = arith.constant 0 : index
      %c0_35 = arith.constant 0 : index
      %52 = vector.load %arg6[%c0_33, %c0_34, %c0_35] : memref<1x128x128xf32, #tpu.memory_space<vmem>>, vector<1x128x128xf32>
      %53 = vector.shape_cast %52 : vector<1x128x128xf32> to vector<128x128xf32>
      %54 = vector.shape_cast %51 : vector<128x128xf32> to vector<1x128x128xf32>
      tpu.vector_store %arg6[%c0_33, %c0_34, %c0_35], %54 {strides = array<i32>} : memref<1x128x128xf32, #tpu.memory_space<vmem>>, vector<1x128x128xf32>,
    } else {
    }
    return
  }
  func.func @transform_0(%arg0: i32, %arg1: i32, %arg2: i32) -> (i32, i32, i32) {
    %c0_i32 = arith.constant 0 : i32
    %c0_i32_0 = arith.constant 0 : i32
    return %arg0, %arg1, %c0_i32 : i32, i32, i32
  }
  func.func @transform_1(%arg0: i32, %arg1: i32, %arg2: i32) -> (i32, i32, i32) {
    %c0_i32 = arith.constant 0 : i32
    %c0_i32_0 = arith.constant 0 : i32
    return %arg0, %arg2, %c0_i32 : i32, i32, i32
  }
  func.func @transform_2(%arg0: i32, %arg1: i32, %arg2: i32) -> (i32, i32, i32) {
    %c0_i32 = arith.constant 0 : i32
    %c0_i32_0 = arith.constant 0 : i32
    return %arg0, %arg2, %c0_i32 : i32, i32, i32
  }
  func.func @transform_3(%arg0: i32, %arg1: i32, %arg2: i32) -> (i32, i32, i32) {
    %c0_i32 = arith.constant 0 : i32
    %c0_i32_0 = arith.constant 0 : i32
    return %arg0, %arg1, %c0_i32 : i32, i32, i32
  }
}

</mosaic_0001>

<llo_original>
// kernel: tpu_custom_call.1
$region0: #{tpu_custom_call.1}
  #allocation0 [shape = 'u32[]', space=smem, size = 0x4, offset = 0x4, fixed_abs, tag = 'smem constant byte address 0x4 - core index']
  #allocation1 [shape = 'u32[144,128]{1,0:T(1,128)}', space=vmem, size = 0x12000, scoped, tag = 'internal scratch']
  #allocation2 [shape = 'f32[128,1]{1,0:T(8,128)}', space=vmem, size = 0x10000, scoped, tag = 'scratch operand']
  #allocation3 [shape = 'f32[128,1]{1,0:T(8,128)}', space=vmem, size = 0x10000, scoped, tag = 'scratch operand']
  #allocation4 [shape = 'f32[128,128]{1,0:T(8,128)}', space=vmem, size = 0x10000, scoped, tag = 'scratch operand']
  %s0 = inlined_call_operand.hbm [shape: f32[2,128,128], index: 0, kind: input, shape index: {}]
  %s1 = inlined_call_operand.hbm [shape: f32[2,128,128], index: 1, kind: input, shape index: {}]
  %s2 = inlined_call_operand.hbm [shape: f32[2,128,128], index: 2, kind: input, shape index: {}]
  %s3 = inlined_call_operand.hbm [shape: f32[2,128,128], index: 3, kind: output, shape index: {}]
  %s4 = sld [smem:[#allocation0]]
  $region65: #{tpu_custom_call.1} parent=0
    _
  %s6 = ssub.s32 1, %s4
  %s7 = scalar_select 0, %s6, %s4
  $region1: #{tpu_custom_call.1} parent=0
    #allocation5 [shape = 'u8[131072]{0}', space=vmem, size = 0x20000, scoped, tag = 'input window, operand 0']
    #allocation6 [shape = 's32[2]{0}', space=sflag, size = 0x8, scoped, tag = 'scoped memory for tpu_custom_call.1']
    #allocation7 [shape = 's32[2]{0}', space=sflag, size = 0x8, scoped, tag = 'scoped memory for tpu_custom_call.1']
    #allocation8 [shape = 'u8[131072]{0}', space=vmem, size = 0x20000, scoped, tag = 'input window, operand 1']
    #allocation9 [shape = 's32[2]{0}', space=sflag, size = 0x8, scoped, tag = 'scoped memory for tpu_custom_call.1']
    #allocation10 [shape = 'u8[131072]{0}', space=vmem, size = 0x20000, scoped, tag = 'input window, operand 2']
    #allocation11 [shape = 'u8[131072]{0}', space=vmem, size = 0x20000, scoped, tag = 'output window, operand 0']
    %8 = vsyncpa [#allocation6], 0
    %s9 = scalar_lea.sflag [#allocation6], 1
    %10 = vsyncpa %s9, 0
    %11 = vsyncpa [#allocation9], 0
    %s12 = scalar_lea.sflag [#allocation9], 1
    %13 = vsyncpa %s12, 0
    %14 = vsyncpa [#allocation7], 0
    %s15 = scalar_lea.sflag [#allocation7], 1
    %16 = vsyncpa %s15, 0
    loop: start=0, step=1, limit=4
    $region2: #{tpu_custom_call.1} parent=1 // loop_pre_header
      _
    $region3: #{tpu_custom_call.1} parent=1 // loop_header
      %s18 = sphi 0, %s22
      %p19 = scmp.ge.s32.totalorder %s18, 4
      %s25 = sphi 0, %s44
      %s26 = sphi 0, %s40
      %s27 = sphi 0, %s36
      %s28 = sphi 0, %s25
      %s29 = sphi 0, %s26
      %s30 = sphi 0, %s27
      %s31 = sphi 0, %s28
      %s32 = sphi 0, %s29
      %s33 = sphi 0, %s30
      %s49 = sphi 0, %s51
      %s52 = sphi 0, %s49
      %s53 = sphi 0, %s52
      %s69 = sphi 0, %s53
      %s77 = sphi 0, %s79
      %s80 = sphi 0, %s77
      %s81 = sphi 0, %s80
      %s97 = sphi 0, %s81
      %s105 = sphi 0, %s107
      %s108 = sphi 0, %s105
      %s109 = sphi 0, %s108
      %s125 = sphi 0, %s109
      %s133 = sphi 0, %s135
      %s136 = sphi 0, %s133
      %s137 = sphi 0, %s136
      %s153 = sphi 0, %s137
    $region4: #{tpu_custom_call.1} parent=1 // loop_header_branch
      %21 = sbr.rel (%p19) target = $region8
    $region5: #{tpu_custom_call.1} parent=1 // loop_body
      %s23 = ssub.s32 %s18, 1
      %s24 = ssub.s32 %s18, 2
      %s34 = sadd.s32 1, %s27
      %p35 = scmp.ge.s32.totalorder %s34, 1
      %s36 = scalar_select %p35, 0, %s34
      %s37 = sadd.s32 1, %s26
      %s38 = scalar_select %p35, %s37, %s26
      %p39 = scmp.ge.s32.totalorder %s38, 1
      %s40 = scalar_select %p39, 0, %s38
      %s41 = sadd.s32 1, %s25
      %s42 = scalar_select %p39, %s41, %s25
      %p43 = scmp.ge.s32.totalorder %s42, 2
      %s44 = scalar_select %p43, 0, %s42
      %s45 = ssub.s32 %s25, %s44
      %s46 = ssub.s32 %s26, %s40
      %s47 = sor.u32 %s45, %s46
      %p48 = scmp.eq.s32.totalorder %s47, 0
      %s50 = sadd.s32 %s49, 1
      %s51 = scalar_select %p48, %s49, %s50
      %p54 = pneg %p48
      %p55 = scmp.eq.s32.totalorder %s18, 1
      %p56 = por %p54, %p55
      %p57 = scmp.ne.s32.totalorder %s49, %s52
      %p58 = scmp.eq.s32.totalorder %s18, 0
      %p59 = por %p57, %p58
      %p60 = scmp.ne.s32.totalorder %s49, %s52
      %p61 = scmp.eq.s32.totalorder %s23, 1
      %p62 = por %p60, %p61
      %p63 = scmp.ne.s32.totalorder %s52, %s53
      %p64 = scmp.eq.s32.totalorder %s23, 0
      %p65 = por %p63, %p64
      %p66 = scmp.ne.s32.totalorder %s52, %s53
      %p67 = scmp.eq.s32.totalorder %s24, 1
      %p68 = por %p66, %p67
      %p70 = scmp.ne.s32.totalorder %s53, %s69
      %p71 = scmp.eq.s32.totalorder %s24, 0
      %p72 = por %p70, %p71
      %s73 = ssub.s32 %s25, %s44
      %s74 = ssub.s32 %s27, %s36
      %s75 = sor.u32 %s73, %s74
      %p76 = scmp.eq.s32.totalorder %s75, 0
      %s78 = sadd.s32 %s77, 1
      %s79 = scalar_select %p76, %s77, %s78
      %p82 = pneg %p76
      %p83 = scmp.eq.s32.totalorder %s18, 1
      %p84 = por %p82, %p83
      %p85 = scmp.ne.s32.totalorder %s77, %s80
      %p86 = scmp.eq.s32.totalorder %s18, 0
      %p87 = por %p85, %p86
      %p88 = scmp.ne.s32.totalorder %s77, %s80
      %p89 = scmp.eq.s32.totalorder %s23, 1
      %p90 = por %p88, %p89
      %p91 = scmp.ne.s32.totalorder %s80, %s81
      %p92 = scmp.eq.s32.totalorder %s23, 0
      %p93 = por %p91, %p92
      %p94 = scmp.ne.s32.totalorder %s80, %s81
      %p95 = scmp.eq.s32.totalorder %s24, 1
      %p96 = por %p94, %p95
      %p98 = scmp.ne.s32.totalorder %s81, %s97
      %p99 = scmp.eq.s32.totalorder %s24, 0
      %p100 = por %p98, %p99
      %s101 = ssub.s32 %s25, %s44
      %s102 = ssub.s32 %s27, %s36
      %s103 = sor.u32 %s101, %s102
      %p104 = scmp.eq.s32.totalorder %s103, 0
      %s106 = sadd.s32 %s105, 1
      %s107 = scalar_select %p104, %s105, %s106
      %p110 = pneg %p104
      %p111 = scmp.eq.s32.totalorder %s18, 1
      %p112 = por %p110, %p111
      %p113 = scmp.ne.s32.totalorder %s105, %s108
      %p114 = scmp.eq.s32.totalorder %s18, 0
      %p115 = por %p113, %p114
      %p116 = scmp.ne.s32.totalorder %s105, %s108
      %p117 = scmp.eq.s32.totalorder %s23, 1
      %p118 = por %p116, %p117
      %p119 = scmp.ne.s32.totalorder %s108, %s109
      %p120 = scmp.eq.s32.totalorder %s23, 0
      %p121 = por %p119, %p120
      %p122 = scmp.ne.s32.totalorder %s108, %s109
      %p123 = scmp.eq.s32.totalorder %s24, 1
      %p124 = por %p122, %p123
      %p126 = scmp.ne.s32.totalorder %s109, %s125
      %p127 = scmp.eq.s32.totalorder %s24, 0
      %p128 = por %p126, %p127
      %s129 = ssub.s32 %s25, %s44
      %s130 = ssub.s32 %s26, %s40
      %s131 = sor.u32 %s129, %s130
      %p132 = scmp.eq.s32.totalorder %s131, 0
      %s134 = sadd.s32 %s133, 1
      %s135 = scalar_select %p132, %s133, %s134
      %p138 = pneg %p132
      %p139 = scmp.eq.s32.totalorder %s18, 1
      %p140 = por %p138, %p139
      %p141 = scmp.ne.s32.totalorder %s133, %s136
      %p142 = scmp.eq.s32.totalorder %s18, 0
      %p143 = por %p141, %p142
      %p144 = scmp.ne.s32.totalorder %s133, %s136
      %p145 = scmp.eq.s32.totalorder %s23, 1
      %p146 = por %p144, %p145
      %p147 = scmp.ne.s32.totalorder %s136, %s137
      %p148 = scmp.eq.s32.totalorder %s23, 0
      %p149 = por %p147, %p148
      %p150 = scmp.ne.s32.totalorder %s136, %s137
      %p151 = scmp.eq.s32.totalorder %s24, 1
      %p152 = por %p150, %p151
      %p154 = scmp.ne.s32.totalorder %s137, %s153
      %p155 = scmp.eq.s32.totalorder %s24, 0
      %p156 = por %p154, %p155
      %p157 = scmp.le.s32.totalorder 1, %s18
      %p158 = scmp.lt.s32.totalorder %s18, 3
      %p159 = pnand %p157, %p158
      %p160 = pneg %p159
      // Predicated region
      $region9: #{tpu_custom_call.1} parent=5 // pred_check
        _
      $region10: #{tpu_custom_call.1} parent=5 // pred_check_branch
        %162 = sbr.rel (%p159) target = $region12
      $region11: #{tpu_custom_call.1} parent=5 // pred_region
        %s163 = ssub.s32 %s18, 1
      $region12: #{tpu_custom_call.1} parent=5 // pred_fallthru
        _
      %p164 = scmp.lt.s32.totalorder %s18, 2
      // Predicated region
      $region13: #{tpu_custom_call.1} parent=5 // pred_check
        %p165 = pneg %p164
      $region14: #{tpu_custom_call.1} parent=5 // pred_check_branch
        %167 = sbr.rel (%p165) target = $region16
      $region15: #{tpu_custom_call.1} parent=5 // pred_region
        // Predicated region
        $region17: #{tpu_custom_call.1} parent=15 // pred_check
          %p168 = pneg %p59
        $region18: #{tpu_custom_call.1} parent=15 // pred_check_branch
          %170 = sbr.rel (%p168) target = $region20
        $region19: #{tpu_custom_call.1} parent=15 // pred_region
          %s171 = sand.u32 %s49, 1
          %s172 = scalar_lea.sflag [#allocation6], %s171
          %s173 = sand.u32 %s49, 1
          %s174 = smul.addr %s173, 128
          %s175 = scalar_lea.vmem [#allocation5], %s174
          %s176 = smul.u32 16, %s26
          %s178 = ssub.s32 2048, 2048
          %179 = vsyncadd %s172, %s178
          %s180 = smul.addr %s25, 16
          %s181 = sadd.s32 %s176, %s180
          %s182 = smul.addr %s181, 128
          %s183 = scalar_lea.hbm %s0, %s182
          %s184 = sshll.u32 %s175, 4
          %s185 = int_to_ptr.vmem [resolvable:$true] %s184
          %190 = dma.hbm_to_vmem [thread:$0]  %s183, 2048, %s185, %s172, 128, 128, 8
        $region20: #{tpu_custom_call.1} parent=15 // pred_fallthru
          _
        // Predicated region
        $region21: #{tpu_custom_call.1} parent=15 // pred_check
          %p191 = pneg %p87
        $region22: #{tpu_custom_call.1} parent=15 // pred_check_branch
          %193 = sbr.rel (%p191) target = $region24
        $region23: #{tpu_custom_call.1} parent=15 // pred_region
          %s194 = sand.u32 %s18, 1
          %s195 = scalar_lea.sflag [#allocation9], %s194
          %s196 = sand.u32 %s77, 1
          %s197 = smul.addr %s196, 128
          %s198 = scalar_lea.vmem [#allocation8], %s197
          %s199 = smul.u32 16, %s27
          %s201 = ssub.s32 2048, 2048
          %202 = vsyncadd %s195, %s201
          %s203 = smul.addr %s25, 16
          %s204 = sadd.s32 %s199, %s203
          %s205 = smul.addr %s204, 128
          %s206 = scalar_lea.hbm %s1, %s205
          %s207 = sshll.u32 %s198, 4
          %s208 = int_to_ptr.vmem [resolvable:$true] %s207
          %213 = dma.hbm_to_vmem [thread:$0]  %s206, 2048, %s208, %s195, 128, 128, 8
        $region24: #{tpu_custom_call.1} parent=15 // pred_fallthru
          _
        // Predicated region
        $region25: #{tpu_custom_call.1} parent=15 // pred_check
          %p214 = pneg %p115
        $region26: #{tpu_custom_call.1} parent=15 // pred_check_branch
          %216 = sbr.rel (%p214) target = $region28
        $region27: #{tpu_custom_call.1} parent=15 // pred_region
          %s217 = sand.u32 %s18, 1
          %s218 = scalar_lea.sflag [#allocation9], %s217
          %s219 = sand.u32 %s105, 1
          %s220 = smul.addr %s219, 128
          %s221 = scalar_lea.vmem [#allocation10], %s220
          %s222 = smul.u32 16, %s27
          %s224 = ssub.s32 2048, 2048
          %225 = vsyncadd %s218, %s224
          %s226 = smul.addr %s25, 16
          %s227 = sadd.s32 %s222, %s226
          %s228 = smul.addr %s227, 128
          %s229 = scalar_lea.hbm %s2, %s228
          %s230 = sshll.u32 %s221, 4
          %s231 = int_to_ptr.vmem [resolvable:$true] %s230
          %236 = dma.hbm_to_vmem [thread:$0]  %s229, 2048, %s231, %s218, 128, 128, 8
        $region28: #{tpu_custom_call.1} parent=15 // pred_fallthru
          _
      $region16: #{tpu_custom_call.1} parent=5 // pred_fallthru
        _
      %p237 = scmp.le.s32.totalorder 1, %s18
      %p238 = scmp.lt.s32.totalorder %s18, 3
      %p239 = pnand %p237, %p238
      %p240 = pneg %p239
      // Predicated region
      $region29: #{tpu_custom_call.1} parent=5 // pred_check
        _
      $region30: #{tpu_custom_call.1} parent=5 // pred_check_branch
        %242 = sbr.rel (%p239) target = $region32
      $region31: #{tpu_custom_call.1} parent=5 // pred_region
        %s243 = ssub.s32 %s18, 1
        %s244 = sand.u32 %s52, 1
        %s245 = scalar_lea.sflag [#allocation6], %s244
        %s246 = sand.u32 %s52, 1
        %s247 = smul.addr %s246, 128
        %s248 = scalar_lea.vmem [#allocation5], %s247
        // Predicated region
        $region33: #{tpu_custom_call.1} parent=31 // pred_check
          %p249 = pneg %p65
        $region34: #{tpu_custom_call.1} parent=31 // pred_check_branch
          %251 = sbr.rel (%p249) target = $region36
        $region35: #{tpu_custom_call.1} parent=31 // pred_region
          %252 = dma.done %s245, 2048
        $region36: #{tpu_custom_call.1} parent=31 // pred_fallthru
          _
        %s253 = sand.u32 %s23, 1
        %s254 = scalar_lea.sflag [#allocation9], %s253
        %s255 = sand.u32 %s80, 1
        %s256 = smul.addr %s255, 128
        %s257 = scalar_lea.vmem [#allocation8], %s256
        // Predicated region
        $region37: #{tpu_custom_call.1} parent=31 // pred_check
          %p258 = pneg %p93
        $region38: #{tpu_custom_call.1} parent=31 // pred_check_branch
          %260 = sbr.rel (%p258) target = $region40
        $region39: #{tpu_custom_call.1} parent=31 // pred_region
          %261 = dma.done %s254, 2048
        $region40: #{tpu_custom_call.1} parent=31 // pred_fallthru
          _
        %s262 = sand.u32 %s23, 1
        %s263 = scalar_lea.sflag [#allocation9], %s262
        %s264 = sand.u32 %s108, 1
        %s265 = smul.addr %s264, 128
        %s266 = scalar_lea.vmem [#allocation10], %s265
        // Predicated region
        $region41: #{tpu_custom_call.1} parent=31 // pred_check
          %p267 = pneg %p121
        $region42: #{tpu_custom_call.1} parent=31 // pred_check_branch
          %269 = sbr.rel (%p267) target = $region44
        $region43: #{tpu_custom_call.1} parent=31 // pred_region
          %270 = dma.done %s263, 2048
        $region44: #{tpu_custom_call.1} parent=31 // pred_fallthru
          _
        %s271 = sand.u32 %s52, 1
        %s272 = scalar_lea.sflag [#allocation6], %s271
        %s273 = sand.u32 %s52, 1
        %s274 = smul.addr %s273, 128
        %s275 = scalar_lea.vmem [#allocation5], %s274
        %p276 = pneg %p65
        %p277 = pneg %p62
        %s278 = sand.u32 %s23, 1
        %s279 = scalar_lea.sflag [#allocation9], %s278
        %s280 = sand.u32 %s80, 1
        %s281 = smul.addr %s280, 128
        %s282 = scalar_lea.vmem [#allocation8], %s281
        %p283 = pneg %p93
        %p284 = pneg %p90
        %s285 = sand.u32 %s23, 1
        %s286 = scalar_lea.sflag [#allocation9], %s285
        %s287 = sand.u32 %s108, 1
        %s288 = smul.addr %s287, 128
        %s289 = scalar_lea.vmem [#allocation10], %s288
        %p290 = pneg %p121
        %p291 = pneg %p118
        %p292 = pneg %p149
        %p293 = pneg %p146
        %s294 = sand.u32 %s136, 1
        %s295 = scalar_lea.sflag [#allocation7], %s294
        %s296 = sand.u32 %s136, 1
        %s297 = smul.addr %s296, 128
        %s298 = scalar_lea.vmem [#allocation11], %s297
        %s299 = smul.u32 16, %s29
        %s300 = smul.u32 16, %s30
        %s301 = smul.u32 16, %s30
        %s302 = smul.u32 16, %s29
        %p303 = scmp.eq.s32.totalorder %s30, 0
        // Predicated region
        $region45: #{tpu_custom_call.1} parent=31 // pred_check
          %p304 = pneg %p303
        $region46: #{tpu_custom_call.1} parent=31 // pred_check_branch
          %306 = sbr.rel (%p304) target = $region48
        $region47: #{tpu_custom_call.1} parent=31 // pred_region
          %vm307 = vcmask 7168
          %308 = vst.msk [vmem:[#allocation2] sm:$0xff] %vm307, -1e+30
          %309 = vst.msk [vmem:[#allocation2 + $0x8] sm:$0xff] %vm307, -1e+30
          %310 = vst.msk [vmem:[#allocation2 + $0x10] sm:$0xff] %vm307, -1e+30
          %311 = vst.msk [vmem:[#allocation2 + $0x18] sm:$0xff] %vm307, -1e+30
          %312 = vst.msk [vmem:[#allocation2 + $0x20] sm:$0xff] %vm307, -1e+30
          %313 = vst.msk [vmem:[#allocation2 + $0x28] sm:$0xff] %vm307, -1e+30
          %314 = vst.msk [vmem:[#allocation2 + $0x30] sm:$0xff] %vm307, -1e+30
          %315 = vst.msk [vmem:[#allocation2 + $0x38] sm:$0xff] %vm307, -1e+30
          %316 = vst.msk [vmem:[#allocation2 + $0x40] sm:$0xff] %vm307, -1e+30
          %317 = vst.msk [vmem:[#allocation2 + $0x48] sm:$0xff] %vm307, -1e+30
          %318 = vst.msk [vmem:[#allocation2 + $0x50] sm:$0xff] %vm307, -1e+30
          %319 = vst.msk [vmem:[#allocation2 + $0x58] sm:$0xff] %vm307, -1e+30
          %320 = vst.msk [vmem:[#allocation2 + $0x60] sm:$0xff] %vm307, -1e+30
          %321 = vst.msk [vmem:[#allocation2 + $0x68] sm:$0xff] %vm307, -1e+30
          %322 = vst.msk [vmem:[#allocation2 + $0x70] sm:$0xff] %vm307, -1e+30
          %323 = vst.msk [vmem:[#allocation2 + $0x78] sm:$0xff] %vm307, -1e+30
          %324 = vst.msk [vmem:[#allocation3] sm:$0xff] %vm307, 0.0
          %325 = vst.msk [vmem:[#allocation3 + $0x8] sm:$0xff] %vm307, 0.0
          %326 = vst.msk [vmem:[#allocation3 + $0x10] sm:$0xff] %vm307, 0.0
          %327 = vst.msk [vmem:[#allocation3 + $0x18] sm:$0xff] %vm307, 0.0
          %328 = vst.msk [vmem:[#allocation3 + $0x20] sm:$0xff] %vm307, 0.0
          %329 = vst.msk [vmem:[#allocation3 + $0x28] sm:$0xff] %vm307, 0.0
          %330 = vst.msk [vmem:[#allocation3 + $0x30] sm:$0xff] %vm307, 0.0
          %331 = vst.msk [vmem:[#allocation3 + $0x38] sm:$0xff] %vm307, 0.0
          %332 = vst.msk [vmem:[#allocation3 + $0x40] sm:$0xff] %vm307, 0.0
          %333 = vst.msk [vmem:[#allocation3 + $0x48] sm:$0xff] %vm307, 0.0
          %334 = vst.msk [vmem:[#allocation3 + $0x50] sm:$0xff] %vm307, 0.0
          %335 = vst.msk [vmem:[#allocation3 + $0x58] sm:$0xff] %vm307, 0.0
          %336 = vst.msk [vmem:[#allocation3 + $0x60] sm:$0xff] %vm307, 0.0
          %337 = vst.msk [vmem:[#allocation3 + $0x68] sm:$0xff] %vm307, 0.0
          %338 = vst.msk [vmem:[#allocation3 + $0x70] sm:$0xff] %vm307, 0.0
          %339 = vst.msk [vmem:[#allocation3 + $0x78] sm:$0xff] %vm307, 0.0
          %340 = vst [vmem:[#allocation4] sm:$0xff] 0.0
          %341 = vst [vmem:[#allocation4 + $0x8] sm:$0xff] 0.0
          %342 = vst [vmem:[#allocation4 + $0x10] sm:$0xff] 0.0
          %343 = vst [vmem:[#allocation4 + $0x18] sm:$0xff] 0.0
          %344 = vst [vmem:[#allocation4 + $0x20] sm:$0xff] 0.0
          %345 = vst [vmem:[#allocation4 + $0x28] sm:$0xff] 0.0
          %346 = vst [vmem:[#allocation4 + $0x30] sm:$0xff] 0.0
          %347 = vst [vmem:[#allocation4 + $0x38] sm:$0xff] 0.0
          %348 = vst [vmem:[#allocation4 + $0x40] sm:$0xff] 0.0
          %349 = vst [vmem:[#allocation4 + $0x48] sm:$0xff] 0.0
          %350 = vst [vmem:[#allocation4 + $0x50] sm:$0xff] 0.0
          %351 = vst [vmem:[#allocation4 + $0x58] sm:$0xff] 0.0
          %352 = vst [vmem:[#allocation4 + $0x60] sm:$0xff] 0.0
          %353 = vst [vmem:[#allocation4 + $0x68] sm:$0xff] 0.0
          %354 = vst [vmem:[#allocation4 + $0x70] sm:$0xff] 0.0
          %355 = vst [vmem:[#allocation4 + $0x78] sm:$0xff] 0.0
        $region48: #{tpu_custom_call.1} parent=31 // pred_fallthru
          _
        %v356 = vld [vmem:[%s248] sm:$0xff]
        %v357 = vld [vmem:[%s248 + $0x8] sm:$0xff]
        %v358 = vld [vmem:[%s248 + $0x10] sm:$0xff]
        %v359 = vld [vmem:[%s248 + $0x18] sm:$0xff]
        %v360 = vld [vmem:[%s248 + $0x20] sm:$0xff]
        %v361 = vld [vmem:[%s248 + $0x28] sm:$0xff]
        %v362 = vld [vmem:[%s248 + $0x30] sm:$0xff]
        %v363 = vld [vmem:[%s248 + $0x38] sm:$0xff]
        %v364 = vld [vmem:[%s248 + $0x40] sm:$0xff]
        %v365 = vld [vmem:[%s248 + $0x48] sm:$0xff]
        %v366 = vld [vmem:[%s248 + $0x50] sm:$0xff]
        %v367 = vld [vmem:[%s248 + $0x58] sm:$0xff]
        %v368 = vld [vmem:[%s248 + $0x60] sm:$0xff]
        %v369 = vld [vmem:[%s248 + $0x68] sm:$0xff]
        %v370 = vld [vmem:[%s248 + $0x70] sm:$0xff]
        %v371 = vld [vmem:[%s248 + $0x78] sm:$0xff]
        %v372 = vmul.f32 %v356, 0.088388346
        %v373 = vmul.f32 %v357, 0.088388346
        %v374 = vmul.f32 %v358, 0.088388346
        %v375 = vmul.f32 %v359, 0.088388346
        %v376 = vmul.f32 %v360, 0.088388346
        %v377 = vmul.f32 %v361, 0.088388346
        %v378 = vmul.f32 %v362, 0.088388346
        %v379 = vmul.f32 %v363, 0.088388346
        %v380 = vmul.f32 %v364, 0.088388346
        %v381 = vmul.f32 %v365, 0.088388346
        %v382 = vmul.f32 %v366, 0.088388346
        %v383 = vmul.f32 %v367, 0.088388346
        %v384 = vmul.f32 %v368, 0.088388346
        %v385 = vmul.f32 %v369, 0.088388346
        %v386 = vmul.f32 %v370, 0.088388346
        %v387 = vmul.f32 %v371, 0.088388346
        %v388 = vld [vmem:[%s257] sm:$0xff]
        %v389 = vld [vmem:[%s257 + $0x8] sm:$0xff]
        %v390 = vld [vmem:[%s257 + $0x10] sm:$0xff]
        %v391 = vld [vmem:[%s257 + $0x18] sm:$0xff]
        %v392 = vld [vmem:[%s257 + $0x20] sm:$0xff]
        %v393 = vld [vmem:[%s257 + $0x28] sm:$0xff]
        %v394 = vld [vmem:[%s257 + $0x30] sm:$0xff]
        %v395 = vld [vmem:[%s257 + $0x38] sm:$0xff]
        %v396 = vld [vmem:[%s257 + $0x40] sm:$0xff]
        %v397 = vld [vmem:[%s257 + $0x48] sm:$0xff]
        %v398 = vld [vmem:[%s257 + $0x50] sm:$0xff]
        %v399 = vld [vmem:[%s257 + $0x58] sm:$0xff]
        %v400 = vld [vmem:[%s257 + $0x60] sm:$0xff]
        %v401 = vld [vmem:[%s257 + $0x68] sm:$0xff]
        %v402 = vld [vmem:[%s257 + $0x70] sm:$0xff]
        %v403 = vld [vmem:[%s257 + $0x78] sm:$0xff]
        %v404 = vld [vmem:[%s266] sm:$0xff]
        %v405 = vld [vmem:[%s266 + $0x8] sm:$0xff]
        %v406 = vld [vmem:[%s266 + $0x10] sm:$0xff]
        %v407 = vld [vmem:[%s266 + $0x18] sm:$0xff]
        %v408 = vld [vmem:[%s266 + $0x20] sm:$0xff]
        %v409 = vld [vmem:[%s266 + $0x28] sm:$0xff]
        %v410 = vld [vmem:[%s266 + $0x30] sm:$0xff]
        %v411 = vld [vmem:[%s266 + $0x38] sm:$0xff]
        %v412 = vld [vmem:[%s266 + $0x40] sm:$0xff]
        %v413 = vld [vmem:[%s266 + $0x48] sm:$0xff]
        %v414 = vld [vmem:[%s266 + $0x50] sm:$0xff]
        %v415 = vld [vmem:[%s266 + $0x58] sm:$0xff]
        %v416 = vld [vmem:[%s266 + $0x60] sm:$0xff]
        %v417 = vld [vmem:[%s266 + $0x68] sm:$0xff]
        %v418 = vld [vmem:[%s266 + $0x70] sm:$0xff]
        %v419 = vld [vmem:[%s266 + $0x78] sm:$0xff]
        %420 = vmatprep.subr.mxu0 0.0
        %421 = vmatpush1.xpose.msra.mxu0 %v403
        %422 = vmatprep.subr.mxu0 0.0
        %423 = vmatpush1.xpose.msra.mxu0 %v402
        %424 = vmatprep.subr.mxu0 0.0
        %425 = vmatpush1.xpose.msra.mxu0 %v401
        %426 = vmatprep.subr.mxu0 0.0
        %427 = vmatpush1.xpose.msra.mxu0 %v400
        %428 = vmatprep.subr.mxu0 0.0
        %429 = vmatpush1.xpose.msra.mxu0 %v399
        %430 = vmatprep.subr.mxu0 0.0
        %431 = vmatpush1.xpose.msra.mxu0 %v398
        %432 = vmatprep.subr.mxu0 0.0
        %433 = vmatpush1.xpose.msra.mxu0 %v397
        %434 = vmatprep.subr.mxu0 0.0
        %435 = vmatpush1.xpose.msra.mxu0 %v396
        %436 = vmatprep.subr.mxu0 0.0
        %437 = vmatpush1.xpose.msra.mxu0 %v395
        %438 = vmatprep.subr.mxu0 0.0
        %439 = vmatpush1.xpose.msra.mxu0 %v394
        %440 = vmatprep.subr.mxu0 0.0
        %441 = vmatpush1.xpose.msra.mxu0 %v393
        %442 = vmatprep.subr.mxu0 0.0
        %443 = vmatpush1.xpose.msra.mxu0 %v392
        %444 = vmatprep.subr.mxu0 0.0
        %445 = vmatpush1.xpose.msra.mxu0 %v391
        %446 = vmatprep.subr.mxu0 0.0
        %447 = vmatpush1.xpose.msra.mxu0 %v390
        %448 = vmatprep.subr.mxu0 0.0
        %449 = vmatpush1.xpose.msra.mxu0 %v389
        %450 = vmatprep.subr.mxu0 0.0
        %451 = vmatpush1.xpose.msra.mxu0 %v388
        %452 = vmatprep.subr.mxu0 0.0
        %453 = vmatpush2.xpose.msra.mxu0 0.0
        %454 = vmatprep.subr.mxu0 0.0
        %455 = vmatpush2.xpose.msra.mxu0 0.0
        %456 = vmatprep.subr.mxu0 0.0
        %457 = vmatpush2.xpose.msra.mxu0 0.0
        %458 = vmatprep.subr.mxu0 0.0
        %459 = vmatpush2.xpose.msra.mxu0 0.0
        %460 = vmatprep.subr.mxu0 0.0
        %461 = vmatpush2.xpose.msra.mxu0 0.0
        %462 = vmatprep.subr.mxu0 0.0
        %463 = vmatpush2.xpose.msra.mxu0 0.0
        %464 = vmatprep.subr.mxu0 0.0
        %465 = vmatpush2.xpose.msra.mxu0 0.0
        %466 = vmatprep.subr.mxu0 0.0
        %467 = vmatpush2.xpose.msra.mxu0 0.0
        %468 = vmatprep.subr.mxu0 0.0
        %469 = vmatpush2.xpose.msra.mxu0 0.0
        %470 = vmatprep.subr.mxu0 0.0
        %471 = vmatpush2.xpose.msra.mxu0 0.0
        %472 = vmatprep.subr.mxu0 0.0
        %473 = vmatpush2.xpose.msra.mxu0 0.0
        %474 = vmatprep.subr.mxu0 0.0
        %475 = vmatpush2.xpose.msra.mxu0 0.0
        %476 = vmatprep.subr.mxu0 0.0
        %477 = vmatpush2.xpose.msra.mxu0 0.0
        %478 = vmatprep.subr.mxu0 0.0
        %479 = vmatpush2.xpose.msra.mxu0 0.0
        %480 = vmatprep.subr.mxu0 0.0
        %481 = vmatpush2.xpose.msra.mxu0 0.0
        %482 = vmatprep.subr.mxu0 0.0
        %483 = vmatpush2.xpose.msra.mxu0 0.0
        %484 = vmatprep.mubr.f32.mxu0 0.0
        %485 = vmatmul.mubr.f32.gmra.mxu0 %v372
        %v486 = vpop.f32.mrf.mxu0
        %v487 = vadd.f32 0.0, %v486
        %v488 = vpop.f32.mrf.mxu0
        %489 = vmatprep.mubr.f32.mxu0 0.0
        %490 = vmatmul.mubr.f32.gmra.mxu0 %v373
        %v491 = vpop.f32.mrf.mxu0
        %v492 = vadd.f32 0.0, %v491
        %v493 = vpop.f32.mrf.mxu0
        %494 = vmatprep.mubr.f32.mxu0 0.0
        %495 = vmatmul.mubr.f32.gmra.mxu0 %v374
        %v496 = vpop.f32.mrf.mxu0
        %v497 = vadd.f32 0.0, %v496
        %v498 = vpop.f32.mrf.mxu0
        %499 = vmatprep.mubr.f32.mxu0 0.0
        %500 = vmatmul.mubr.f32.gmra.mxu0 %v375
        %v501 = vpop.f32.mrf.mxu0
        %v502 = vadd.f32 0.0, %v501
        %v503 = vpop.f32.mrf.mxu0
        %504 = vmatprep.mubr.f32.mxu0 0.0
        %505 = vmatmul.mubr.f32.gmra.mxu0 %v376
        %v506 = vpop.f32.mrf.mxu0
        %v507 = vadd.f32 0.0, %v506
        %v508 = vpop.f32.mrf.mxu0
        %509 = vmatprep.mubr.f32.mxu0 0.0
        %510 = vmatmul.mubr.f32.gmra.mxu0 %v377
        %v511 = vpop.f32.mrf.mxu0
        %v512 = vadd.f32 0.0, %v511
        %v513 = vpop.f32.mrf.mxu0
        %514 = vmatprep.mubr.f32.mxu0 0.0
        %515 = vmatmul.mubr.f32.gmra.mxu0 %v378
        %v516 = vpop.f32.mrf.mxu0
        %v517 = vadd.f32 0.0, %v516
        %v518 = vpop.f32.mrf.mxu0
        %519 = vmatprep.mubr.f32.mxu0 0.0
        %520 = vmatmul.mubr.f32.gmra.mxu0 %v379
        %v521 = vpop.f32.mrf.mxu0
        %v522 = vadd.f32 0.0, %v521
        %v523 = vpop.f32.mrf.mxu0
        %524 = vmatprep.mubr.f32.mxu0 0.0
        %525 = vmatmul.mubr.f32.gmra.mxu0 %v380
        %v526 = vpop.f32.mrf.mxu0
        %v527 = vadd.f32 0.0, %v526
        %v528 = vpop.f32.mrf.mxu0
        %529 = vmatprep.mubr.f32.mxu0 0.0
        %530 = vmatmul.mubr.f32.gmra.mxu0 %v381
        %v531 = vpop.f32.mrf.mxu0
        %v532 = vadd.f32 0.0, %v531
        %v533 = vpop.f32.mrf.mxu0
        %534 = vmatprep.mubr.f32.mxu0 0.0
        %535 = vmatmul.mubr.f32.gmra.mxu0 %v382
        %v536 = vpop.f32.mrf.mxu0
        %v537 = vadd.f32 0.0, %v536
        %v538 = vpop.f32.mrf.mxu0
        %539 = vmatprep.mubr.f32.mxu0 0.0
        %540 = vmatmul.mubr.f32.gmra.mxu0 %v383
        %v541 = vpop.f32.mrf.mxu0
        %v542 = vadd.f32 0.0, %v541
        %v543 = vpop.f32.mrf.mxu0
        %544 = vmatprep.mubr.f32.mxu0 0.0
        %545 = vmatmul.mubr.f32.gmra.mxu0 %v384
        %v546 = vpop.f32.mrf.mxu0
        %v547 = vadd.f32 0.0, %v546
        %v548 = vpop.f32.mrf.mxu0
        %549 = vmatprep.mubr.f32.mxu0 0.0
        %550 = vmatmul.mubr.f32.gmra.mxu0 %v385
        %v551 = vpop.f32.mrf.mxu0
        %v552 = vadd.f32 0.0, %v551
        %v553 = vpop.f32.mrf.mxu0
        %554 = vmatprep.mubr.f32.mxu0 0.0
        %555 = vmatmul.mubr.f32.gmra.mxu0 %v386
        %v556 = vpop.f32.mrf.mxu0
        %v557 = vadd.f32 0.0, %v556
        %v558 = vpop.f32.mrf.mxu0
        %559 = vmatprep.mubr.f32.mxu0 0.0
        %560 = vmatmul.mubr.f32.gmra.mxu0 %v387
        %v561 = vpop.f32.mrf.mxu0
        %v562 = vadd.f32 0.0, %v561
        %v563 = vpop.f32.mrf.mxu0
        %564 = vdwg.mxu0
        %s565 = smul.u32 %s30, 128
        %v566 = vlaneseq
        %v567 = vand.u32 %v566, 127
        %v568 = vstv %s565
        %v569 = vadd.s32 %v568, %v567
        %vm570 = vcmp.lt.s32.totalorder %v569, 8
        %v571 = vsel %vm570, %v487, -1e+30
        %v572 = vsel %vm570, %v492, -1e+30
        %v573 = vsel %vm570, %v497, -1e+30
        %v574 = vsel %vm570, %v502, -1e+30
        %v575 = vsel %vm570, %v507, -1e+30
        %v576 = vsel %vm570, %v512, -1e+30
        %v577 = vsel %vm570, %v517, -1e+30
        %v578 = vsel %vm570, %v522, -1e+30
        %v579 = vsel %vm570, %v527, -1e+30
        %v580 = vsel %vm570, %v532, -1e+30
        %v581 = vsel %vm570, %v537, -1e+30
        %v582 = vsel %vm570, %v542, -1e+30
        %v583 = vsel %vm570, %v547, -1e+30
        %v584 = vsel %vm570, %v552, -1e+30
        %v585 = vsel %vm570, %v557, -1e+30
        %v586 = vsel %vm570, %v562, -1e+30
        %v587 = vld [vmem:[#allocation2] sm:$0xff]
        %v588 = vld [vmem:[#allocation2 + $0x8] sm:$0xff]
        %v589 = vld [vmem:[#allocation2 + $0x10] sm:$0xff]
        %v590 = vld [vmem:[#allocation2 + $0x18] sm:$0xff]
        %v591 = vld [vmem:[#allocation2 + $0x20] sm:$0xff]
        %v592 = vld [vmem:[#allocation2 + $0x28] sm:$0xff]
        %v593 = vld [vmem:[#allocation2 + $0x30] sm:$0xff]
        %v594 = vld [vmem:[#allocation2 + $0x38] sm:$0xff]
        %v595 = vld [vmem:[#allocation2 + $0x40] sm:$0xff]
        %v596 = vld [vmem:[#allocation2 + $0x48] sm:$0xff]
        %v597 = vld [vmem:[#allocation2 + $0x50] sm:$0xff]
        %v598 = vld [vmem:[#allocation2 + $0x58] sm:$0xff]
        %v599 = vld [vmem:[#allocation2 + $0x60] sm:$0xff]
        %v600 = vld [vmem:[#allocation2 + $0x68] sm:$0xff]
        %v601 = vld [vmem:[#allocation2 + $0x70] sm:$0xff]
        %v602 = vld [vmem:[#allocation2 + $0x78] sm:$0xff]
        %603 = vmax.xlane.f32.xlu0 %v571
        %v604 = vpop.xlane.xlu0 %603
        %605 = vmax.xlane.f32.xlu0 %v572
        %v606 = vpop.xlane.xlu0 %605
        %607 = vmax.xlane.f32.xlu0 %v573
        %v608 = vpop.xlane.xlu0 %607
        %609 = vmax.xlane.f32.xlu0 %v574
        %v610 = vpop.xlane.xlu0 %609
        %611 = vmax.xlane.f32.xlu0 %v575
        %v612 = vpop.xlane.xlu0 %611
        %613 = vmax.xlane.f32.xlu0 %v576
        %v614 = vpop.xlane.xlu0 %613
        %615 = vmax.xlane.f32.xlu0 %v577
        %v616 = vpop.xlane.xlu0 %615
        %617 = vmax.xlane.f32.xlu0 %v578
        %v618 = vpop.xlane.xlu0 %617
        %619 = vmax.xlane.f32.xlu0 %v579
        %v620 = vpop.xlane.xlu0 %619
        %621 = vmax.xlane.f32.xlu0 %v580
        %v622 = vpop.xlane.xlu0 %621
        %623 = vmax.xlane.f32.xlu0 %v581
        %v624 = vpop.xlane.xlu0 %623
        %625 = vmax.xlane.f32.xlu0 %v582
        %v626 = vpop.xlane.xlu0 %625
        %627 = vmax.xlane.f32.xlu0 %v583
        %v628 = vpop.xlane.xlu0 %627
        %629 = vmax.xlane.f32.xlu0 %v584
        %v630 = vpop.xlane.xlu0 %629
        %631 = vmax.xlane.f32.xlu0 %v585
        %v632 = vpop.xlane.xlu0 %631
        %633 = vmax.xlane.f32.xlu0 %v586
        %v634 = vpop.xlane.xlu0 %633
        %v635 = vmax.f32 %v587, %v604
        %v636 = vmax.f32 %v588, %v606
        %v637 = vmax.f32 %v589, %v608
        %v638 = vmax.f32 %v590, %v610
        %v639 = vmax.f32 %v591, %v612
        %v640 = vmax.f32 %v592, %v614
        %v641 = vmax.f32 %v593, %v616
        %v642 = vmax.f32 %v594, %v618
        %v643 = vmax.f32 %v595, %v620
        %v644 = vmax.f32 %v596, %v622
        %v645 = vmax.f32 %v597, %v624
        %v646 = vmax.f32 %v598, %v626
        %v647 = vmax.f32 %v599, %v628
        %v648 = vmax.f32 %v600, %v630
        %v649 = vmax.f32 %v601, %v632
        %v650 = vmax.f32 %v602, %v634
        %v651 = vsub.f32 %v587, %v635
        %v652 = vsub.f32 %v588, %v636
        %v653 = vsub.f32 %v589, %v637
        %v654 = vsub.f32 %v590, %v638
        %v655 = vsub.f32 %v591, %v639
        %v656 = vsub.f32 %v592, %v640
        %v657 = vsub.f32 %v593, %v641
        %v658 = vsub.f32 %v594, %v642
        %v659 = vsub.f32 %v595, %v643
        %v660 = vsub.f32 %v596, %v644
        %v661 = vsub.f32 %v597, %v645
        %v662 = vsub.f32 %v598, %v646
        %v663 = vsub.f32 %v599, %v647
        %v664 = vsub.f32 %v600, %v648
        %v665 = vsub.f32 %v601, %v649
        %v666 = vsub.f32 %v602, %v650
        %v667 = vmul.f32 %v651, 1.442695
        %v668 = vpow.pop %v667
        %v669 = vmul.f32 %v652, 1.442695
        %v670 = vpow.pop %v669
        %v671 = vmul.f32 %v653, 1.442695
        %v672 = vpow.pop %v671
        %v673 = vmul.f32 %v654, 1.442695
        %v674 = vpow.pop %v673
        %v675 = vmul.f32 %v655, 1.442695
        %v676 = vpow.pop %v675
        %v677 = vmul.f32 %v656, 1.442695
        %v678 = vpow.pop %v677
        %v679 = vmul.f32 %v657, 1.442695
        %v680 = vpow.pop %v679
        %v681 = vmul.f32 %v658, 1.442695
        %v682 = vpow.pop %v681
        %v683 = vmul.f32 %v659, 1.442695
        %v684 = vpow.pop %v683
        %v685 = vmul.f32 %v660, 1.442695
        %v686 = vpow.pop %v685
        %v687 = vmul.f32 %v661, 1.442695
        %v688 = vpow.pop %v687
        %v689 = vmul.f32 %v662, 1.442695
        %v690 = vpow.pop %v689
        %v691 = vmul.f32 %v663, 1.442695
        %v692 = vpow.pop %v691
        %v693 = vmul.f32 %v664, 1.442695
        %v694 = vpow.pop %v693
        %v695 = vmul.f32 %v665, 1.442695
        %v696 = vpow.pop %v695
        %v697 = vmul.f32 %v666, 1.442695
        %v698 = vpow.pop %v697
        %700 = vset.pattern.permute.xlu0 0
        %701 = vperm.xlu0 %700, %v635
        %v702 = vpop.permute.xlu0 %701
        %705 = vset.pattern.permute.xlu0 0
        %706 = vperm.xlu0 %705, %v636
        %v707 = vpop.permute.xlu0 %706
        %710 = vset.pattern.permute.xlu0 0
        %711 = vperm.xlu0 %710, %v637
        %v712 = vpop.permute.xlu0 %711
        %715 = vset.pattern.permute.xlu0 0
        %716 = vperm.xlu0 %715, %v638
        %v717 = vpop.permute.xlu0 %716
        %720 = vset.pattern.permute.xlu0 0
        %721 = vperm.xlu0 %720, %v639
        %v722 = vpop.permute.xlu0 %721
        %725 = vset.pattern.permute.xlu0 0
        %726 = vperm.xlu0 %725, %v640
        %v727 = vpop.permute.xlu0 %726
        %730 = vset.pattern.permute.xlu0 0
        %731 = vperm.xlu0 %730, %v641
        %v732 = vpop.permute.xlu0 %731
        %735 = vset.pattern.permute.xlu0 0
        %736 = vperm.xlu0 %735, %v642
        %v737 = vpop.permute.xlu0 %736
        %740 = vset.pattern.permute.xlu0 0
        %741 = vperm.xlu0 %740, %v643
        %v742 = vpop.permute.xlu0 %741
        %745 = vset.pattern.permute.xlu0 0
        %746 = vperm.xlu0 %745, %v644
        %v747 = vpop.permute.xlu0 %746
        %750 = vset.pattern.permute.xlu0 0
        %751 = vperm.xlu0 %750, %v645
        %v752 = vpop.permute.xlu0 %751
        %755 = vset.pattern.permute.xlu0 0
        %756 = vperm.xlu0 %755, %v646
        %v757 = vpop.permute.xlu0 %756
        %760 = vset.pattern.permute.xlu0 0
        %761 = vperm.xlu0 %760, %v647
        %v762 = vpop.permute.xlu0 %761
        %765 = vset.pattern.permute.xlu0 0
        %766 = vperm.xlu0 %765, %v648
        %v767 = vpop.permute.xlu0 %766
        %770 = vset.pattern.permute.xlu0 0
        %771 = vperm.xlu0 %770, %v649
        %v772 = vpop.permute.xlu0 %771
        %775 = vset.pattern.permute.xlu0 0
        %776 = vperm.xlu0 %775, %v650
        %v777 = vpop.permute.xlu0 %776
        %v779 = vsub.f32 %v571, %v702
        %v780 = vsub.f32 %v572, %v707
        %v781 = vsub.f32 %v573, %v712
        %v782 = vsub.f32 %v574, %v717
        %v783 = vsub.f32 %v575, %v722
        %v784 = vsub.f32 %v576, %v727
        %v785 = vsub.f32 %v577, %v732
        %v786 = vsub.f32 %v578, %v737
        %v787 = vsub.f32 %v579, %v742
        %v788 = vsub.f32 %v580, %v747
        %v789 = vsub.f32 %v581, %v752
        %v790 = vsub.f32 %v582, %v757
        %v791 = vsub.f32 %v583, %v762
        %v792 = vsub.f32 %v584, %v767
        %v793 = vsub.f32 %v585, %v772
        %v794 = vsub.f32 %v586, %v777
        %v795 = vmul.f32 %v779, 1.442695
        %v796 = vpow.pop %v795
        %v797 = vmul.f32 %v780, 1.442695
        %v798 = vpow.pop %v797
        %v799 = vmul.f32 %v781, 1.442695
        %v800 = vpow.pop %v799
        %v801 = vmul.f32 %v782, 1.442695
        %v802 = vpow.pop %v801
        %v803 = vmul.f32 %v783, 1.442695
        %v804 = vpow.pop %v803
        %v805 = vmul.f32 %v784, 1.442695
        %v806 = vpow.pop %v805
        %v807 = vmul.f32 %v785, 1.442695
        %v808 = vpow.pop %v807
        %v809 = vmul.f32 %v786, 1.442695
        %v810 = vpow.pop %v809
        %v811 = vmul.f32 %v787, 1.442695
        %v812 = vpow.pop %v811
        %v813 = vmul.f32 %v788, 1.442695
        %v814 = vpow.pop %v813
        %v815 = vmul.f32 %v789, 1.442695
        %v816 = vpow.pop %v815
        %v817 = vmul.f32 %v790, 1.442695
        %v818 = vpow.pop %v817
        %v819 = vmul.f32 %v791, 1.442695
        %v820 = vpow.pop %v819
        %v821 = vmul.f32 %v792, 1.442695
        %v822 = vpow.pop %v821
        %v823 = vmul.f32 %v793, 1.442695
        %v824 = vpow.pop %v823
        %v825 = vmul.f32 %v794, 1.442695
        %v826 = vpow.pop %v825
        %v827 = vsel %vm570, %v796, 0.0
        %v828 = vsel %vm570, %v798, 0.0
        %v829 = vsel %vm570, %v800, 0.0
        %v830 = vsel %vm570, %v802, 0.0
        %v831 = vsel %vm570, %v804, 0.0
        %v832 = vsel %vm570, %v806, 0.0
        %v833 = vsel %vm570, %v808, 0.0
        %v834 = vsel %vm570, %v810, 0.0
        %v835 = vsel %vm570, %v812, 0.0
        %v836 = vsel %vm570, %v814, 0.0
        %v837 = vsel %vm570, %v816, 0.0
        %v838 = vsel %vm570, %v818, 0.0
        %v839 = vsel %vm570, %v820, 0.0
        %v840 = vsel %vm570, %v822, 0.0
        %v841 = vsel %vm570, %v824, 0.0
        %v842 = vsel %vm570, %v826, 0.0
        %v843 = vld [vmem:[#allocation3] sm:$0xff]
        %v844 = vld [vmem:[#allocation3 + $0x8] sm:$0xff]
        %v845 = vld [vmem:[#allocation3 + $0x10] sm:$0xff]
        %v846 = vld [vmem:[#allocation3 + $0x18] sm:$0xff]
        %v847 = vld [vmem:[#allocation3 + $0x20] sm:$0xff]
        %v848 = vld [vmem:[#allocation3 + $0x28] sm:$0xff]
        %v849 = vld [vmem:[#allocation3 + $0x30] sm:$0xff]
        %v850 = vld [vmem:[#allocation3 + $0x38] sm:$0xff]
        %v851 = vld [vmem:[#allocation3 + $0x40] sm:$0xff]
        %v852 = vld [vmem:[#allocation3 + $0x48] sm:$0xff]
        %v853 = vld [vmem:[#allocation3 + $0x50] sm:$0xff]
        %v854 = vld [vmem:[#allocation3 + $0x58] sm:$0xff]
        %v855 = vld [vmem:[#allocation3 + $0x60] sm:$0xff]
        %v856 = vld [vmem:[#allocation3 + $0x68] sm:$0xff]
        %v857 = vld [vmem:[#allocation3 + $0x70] sm:$0xff]
        %v858 = vld [vmem:[#allocation3 + $0x78] sm:$0xff]
        %v859 = vmul.f32 %v668, %v843
        %v860 = vmul.f32 %v670, %v844
        %v861 = vmul.f32 %v672, %v845
        %v862 = vmul.f32 %v674, %v846
        %v863 = vmul.f32 %v676, %v847
        %v864 = vmul.f32 %v678, %v848
        %v865 = vmul.f32 %v680, %v849
        %v866 = vmul.f32 %v682, %v850
        %v867 = vmul.f32 %v684, %v851
        %v868 = vmul.f32 %v686, %v852
        %v869 = vmul.f32 %v688, %v853
        %v870 = vmul.f32 %v690, %v854
        %v871 = vmul.f32 %v692, %v855
        %v872 = vmul.f32 %v694, %v856
        %v873 = vmul.f32 %v696, %v857
        %v874 = vmul.f32 %v698, %v858
        %875 = vadd.xlane.f32.xlu0 %v827
        %v876 = vpop.xlane.xlu0 %875
        %877 = vadd.xlane.f32.xlu0 %v828
        %v878 = vpop.xlane.xlu0 %877
        %879 = vadd.xlane.f32.xlu0 %v829
        %v880 = vpop.xlane.xlu0 %879
        %881 = vadd.xlane.f32.xlu0 %v830
        %v882 = vpop.xlane.xlu0 %881
        %883 = vadd.xlane.f32.xlu0 %v831
        %v884 = vpop.xlane.xlu0 %883
        %885 = vadd.xlane.f32.xlu0 %v832
        %v886 = vpop.xlane.xlu0 %885
        %887 = vadd.xlane.f32.xlu0 %v833
        %v888 = vpop.xlane.xlu0 %887
        %889 = vadd.xlane.f32.xlu0 %v834
        %v890 = vpop.xlane.xlu0 %889
        %891 = vadd.xlane.f32.xlu0 %v835
        %v892 = vpop.xlane.xlu0 %891
        %893 = vadd.xlane.f32.xlu0 %v836
        %v894 = vpop.xlane.xlu0 %893
        %895 = vadd.xlane.f32.xlu0 %v837
        %v896 = vpop.xlane.xlu0 %895
        %897 = vadd.xlane.f32.xlu0 %v838
        %v898 = vpop.xlane.xlu0 %897
        %899 = vadd.xlane.f32.xlu0 %v839
        %v900 = vpop.xlane.xlu0 %899
        %901 = vadd.xlane.f32.xlu0 %v840
        %v902 = vpop.xlane.xlu0 %901
        %903 = vadd.xlane.f32.xlu0 %v841
        %v904 = vpop.xlane.xlu0 %903
        %905 = vadd.xlane.f32.xlu0 %v842
        %v906 = vpop.xlane.xlu0 %905
        %v907 = vadd.f32 %v859, %v876
        %v908 = vadd.f32 %v860, %v878
        %v909 = vadd.f32 %v861, %v880
        %v910 = vadd.f32 %v862, %v882
        %v911 = vadd.f32 %v863, %v884
        %v912 = vadd.f32 %v864, %v886
        %v913 = vadd.f32 %v865, %v888
        %v914 = vadd.f32 %v866, %v890
        %v915 = vadd.f32 %v867, %v892
        %v916 = vadd.f32 %v868, %v894
        %v917 = vadd.f32 %v869, %v896
        %v918 = vadd.f32 %v870, %v898
        %v919 = vadd.f32 %v871, %v900
        %v920 = vadd.f32 %v872, %v902
        %v921 = vadd.f32 %v873, %v904
        %v922 = vadd.f32 %v874, %v906
        %vm923 = vcmask 7168
        %924 = vst.msk [vmem:[#allocation3] sm:$0xff] %vm923, %v907
        %925 = vst.msk [vmem:[#allocation3 + $0x8] sm:$0xff] %vm923, %v908
        %926 = vst.msk [vmem:[#allocation3 + $0x10] sm:$0xff] %vm923, %v909
        %927 = vst.msk [vmem:[#allocation3 + $0x18] sm:$0xff] %vm923, %v910
        %928 = vst.msk [vmem:[#allocation3 + $0x20] sm:$0xff] %vm923, %v911
        %929 = vst.msk [vmem:[#allocation3 + $0x28] sm:$0xff] %vm923, %v912
        %930 = vst.msk [vmem:[#allocation3 + $0x30] sm:$0xff] %vm923, %v913
        %931 = vst.msk [vmem:[#allocation3 + $0x38] sm:$0xff] %vm923, %v914
        %932 = vst.msk [vmem:[#allocation3 + $0x40] sm:$0xff] %vm923, %v915
        %933 = vst.msk [vmem:[#allocation3 + $0x48] sm:$0xff] %vm923, %v916
        %934 = vst.msk [vmem:[#allocation3 + $0x50] sm:$0xff] %vm923, %v917
        %935 = vst.msk [vmem:[#allocation3 + $0x58] sm:$0xff] %vm923, %v918
        %936 = vst.msk [vmem:[#allocation3 + $0x60] sm:$0xff] %vm923, %v919
        %937 = vst.msk [vmem:[#allocation3 + $0x68] sm:$0xff] %vm923, %v920
        %938 = vst.msk [vmem:[#allocation3 + $0x70] sm:$0xff] %vm923, %v921
        %939 = vst.msk [vmem:[#allocation3 + $0x78] sm:$0xff] %vm923, %v922
        %v940 = vld [vmem:[#allocation4] sm:$0xff]
        %v941 = vld [vmem:[#allocation4 + $0x8] sm:$0xff]
        %v942 = vld [vmem:[#allocation4 + $0x10] sm:$0xff]
        %v943 = vld [vmem:[#allocation4 + $0x18] sm:$0xff]
        %v944 = vld [vmem:[#allocation4 + $0x20] sm:$0xff]
        %v945 = vld [vmem:[#allocation4 + $0x28] sm:$0xff]
        %v946 = vld [vmem:[#allocation4 + $0x30] sm:$0xff]
        %v947 = vld [vmem:[#allocation4 + $0x38] sm:$0xff]
        %v948 = vld [vmem:[#allocation4 + $0x40] sm:$0xff]
        %v949 = vld [vmem:[#allocation4 + $0x48] sm:$0xff]
        %v950 = vld [vmem:[#allocation4 + $0x50] sm:$0xff]
        %v951 = vld [vmem:[#allocation4 + $0x58] sm:$0xff]
        %v952 = vld [vmem:[#allocation4 + $0x60] sm:$0xff]
        %v953 = vld [vmem:[#allocation4 + $0x68] sm:$0xff]
        %v954 = vld [vmem:[#allocation4 + $0x70] sm:$0xff]
        %v955 = vld [vmem:[#allocation4 + $0x78] sm:$0xff]
        %957 = vset.pattern.permute.xlu0 0
        %958 = vperm.xlu0 %957, %v668
        %v959 = vpop.permute.xlu0 %958
        %962 = vset.pattern.permute.xlu0 0
        %963 = vperm.xlu0 %962, %v670
        %v964 = vpop.permute.xlu0 %963
        %967 = vset.pattern.permute.xlu0 0
        %968 = vperm.xlu0 %967, %v672
        %v969 = vpop.permute.xlu0 %968
        %972 = vset.pattern.permute.xlu0 0
        %973 = vperm.xlu0 %972, %v674
        %v974 = vpop.permute.xlu0 %973
        %977 = vset.pattern.permute.xlu0 0
        %978 = vperm.xlu0 %977, %v676
        %v979 = vpop.permute.xlu0 %978
        %982 = vset.pattern.permute.xlu0 0
        %983 = vperm.xlu0 %982, %v678
        %v984 = vpop.permute.xlu0 %983
        %987 = vset.pattern.permute.xlu0 0
        %988 = vperm.xlu0 %987, %v680
        %v989 = vpop.permute.xlu0 %988
        %992 = vset.pattern.permute.xlu0 0
        %993 = vperm.xlu0 %992, %v682
        %v994 = vpop.permute.xlu0 %993
        %997 = vset.pattern.permute.xlu0 0
        %998 = vperm.xlu0 %997, %v684
        %v999 = vpop.permute.xlu0 %998
        %1002 = vset.pattern.permute.xlu0 0
        %1003 = vperm.xlu0 %1002, %v686
        %v1004 = vpop.permute.xlu0 %1003
        %1007 = vset.pattern.permute.xlu0 0
        %1008 = vperm.xlu0 %1007, %v688
        %v1009 = vpop.permute.xlu0 %1008
        %1012 = vset.pattern.permute.xlu0 0
        %1013 = vperm.xlu0 %1012, %v690
        %v1014 = vpop.permute.xlu0 %1013
        %1017 = vset.pattern.permute.xlu0 0
        %1018 = vperm.xlu0 %1017, %v692
        %v1019 = vpop.permute.xlu0 %1018
        %1022 = vset.pattern.permute.xlu0 0
        %1023 = vperm.xlu0 %1022, %v694
        %v1024 = vpop.permute.xlu0 %1023
        %1027 = vset.pattern.permute.xlu0 0
        %1028 = vperm.xlu0 %1027, %v696
        %v1029 = vpop.permute.xlu0 %1028
        %1032 = vset.pattern.permute.xlu0 0
        %1033 = vperm.xlu0 %1032, %v698
        %v1034 = vpop.permute.xlu0 %1033
        %v1036 = vmul.f32 %v959, %v940
        %v1037 = vmul.f32 %v964, %v941
        %v1038 = vmul.f32 %v969, %v942
        %v1039 = vmul.f32 %v974, %v943
        %v1040 = vmul.f32 %v979, %v944
        %v1041 = vmul.f32 %v984, %v945
        %v1042 = vmul.f32 %v989, %v946
        %v1043 = vmul.f32 %v994, %v947
        %v1044 = vmul.f32 %v999, %v948
        %v1045 = vmul.f32 %v1004, %v949
        %v1046 = vmul.f32 %v1009, %v950
        %v1047 = vmul.f32 %v1014, %v951
        %v1048 = vmul.f32 %v1019, %v952
        %v1049 = vmul.f32 %v1024, %v953
        %v1050 = vmul.f32 %v1029, %v954
        %v1051 = vmul.f32 %v1034, %v955
        %1052 = vmatprep.subr.mxu0 0.0
        %1053 = vmatpush1.msra.mxu0 %v419
        %1054 = vmatprep.subr.mxu0 0.0
        %1055 = vmatpush1.msra.mxu0 %v418
        %1056 = vmatprep.subr.mxu0 0.0
        %1057 = vmatpush1.msra.mxu0 %v417
        %1058 = vmatprep.subr.mxu0 0.0
        %1059 = vmatpush1.msra.mxu0 %v416
        %1060 = vmatprep.subr.mxu0 0.0
        %1061 = vmatpush1.msra.mxu0 %v415
        %1062 = vmatprep.subr.mxu0 0.0
        %1063 = vmatpush1.msra.mxu0 %v414
        %1064 = vmatprep.subr.mxu0 0.0
        %1065 = vmatpush1.msra.mxu0 %v413
        %1066 = vmatprep.subr.mxu0 0.0
        %1067 = vmatpush1.msra.mxu0 %v412
        %1068 = vmatprep.subr.mxu0 0.0
        %1069 = vmatpush1.msra.mxu0 %v411
        %1070 = vmatprep.subr.mxu0 0.0
        %1071 = vmatpush1.msra.mxu0 %v410
        %1072 = vmatprep.subr.mxu0 0.0
        %1073 = vmatpush1.msra.mxu0 %v409
        %1074 = vmatprep.subr.mxu0 0.0
        %1075 = vmatpush1.msra.mxu0 %v408
        %1076 = vmatprep.subr.mxu0 0.0
        %1077 = vmatpush1.msra.mxu0 %v407
        %1078 = vmatprep.subr.mxu0 0.0
        %1079 = vmatpush1.msra.mxu0 %v406
        %1080 = vmatprep.subr.mxu0 0.0
        %1081 = vmatpush1.msra.mxu0 %v405
        %1082 = vmatprep.subr.mxu0 0.0
        %1083 = vmatpush1.msra.mxu0 %v404
        %1084 = vmatprep.subr.mxu0 0.0
        %1085 = vmatpush2.msra.mxu0 0.0
        %1086 = vmatprep.subr.mxu0 0.0
        %1087 = vmatpush2.msra.mxu0 0.0
        %1088 = vmatprep.subr.mxu0 0.0
        %1089 = vmatpush2.msra.mxu0 0.0
        %1090 = vmatprep.subr.mxu0 0.0
        %1091 = vmatpush2.msra.mxu0 0.0
        %1092 = vmatprep.subr.mxu0 0.0
        %1093 = vmatpush2.msra.mxu0 0.0
        %1094 = vmatprep.subr.mxu0 0.0
        %1095 = vmatpush2.msra.mxu0 0.0
        %1096 = vmatprep.subr.mxu0 0.0
        %1097 = vmatpush2.msra.mxu0 0.0
        %1098 = vmatprep.subr.mxu0 0.0
        %1099 = vmatpush2.msra.mxu0 0.0
        %1100 = vmatprep.subr.mxu0 0.0
        %1101 = vmatpush2.msra.mxu0 0.0
        %1102 = vmatprep.subr.mxu0 0.0
        %1103 = vmatpush2.msra.mxu0 0.0
        %1104 = vmatprep.subr.mxu0 0.0
        %1105 = vmatpush2.msra.mxu0 0.0
        %1106 = vmatprep.subr.mxu0 0.0
        %1107 = vmatpush2.msra.mxu0 0.0
        %1108 = vmatprep.subr.mxu0 0.0
        %1109 = vmatpush2.msra.mxu0 0.0
        %1110 = vmatprep.subr.mxu0 0.0
        %1111 = vmatpush2.msra.mxu0 0.0
        %1112 = vmatprep.subr.mxu0 0.0
        %1113 = vmatpush2.msra.mxu0 0.0
        %1114 = vmatprep.subr.mxu0 0.0
        %1115 = vmatpush2.msra.mxu0 0.0
        %1116 = vmatprep.mubr.f32.mxu0 0.0
        %1117 = vmatmul.mubr.f32.gmra.mxu0 %v827
        %v1118 = vpop.f32.mrf.mxu0
        %v1119 = vadd.f32 0.0, %v1118
        %v1120 = vpop.f32.mrf.mxu0
        %1121 = vmatprep.mubr.f32.mxu0 0.0
        %1122 = vmatmul.mubr.f32.gmra.mxu0 %v828
        %v1123 = vpop.f32.mrf.mxu0
        %v1124 = vadd.f32 0.0, %v1123
        %v1125 = vpop.f32.mrf.mxu0
        %1126 = vmatprep.mubr.f32.mxu0 0.0
        %1127 = vmatmul.mubr.f32.gmra.mxu0 %v829
        %v1128 = vpop.f32.mrf.mxu0
        %v1129 = vadd.f32 0.0, %v1128
        %v1130 = vpop.f32.mrf.mxu0
        %1131 = vmatprep.mubr.f32.mxu0 0.0
        %1132 = vmatmul.mubr.f32.gmra.mxu0 %v830
        %v1133 = vpop.f32.mrf.mxu0
        %v1134 = vadd.f32 0.0, %v1133
        %v1135 = vpop.f32.mrf.mxu0
        %1136 = vmatprep.mubr.f32.mxu0 0.0
        %1137 = vmatmul.mubr.f32.gmra.mxu0 %v831
        %v1138 = vpop.f32.mrf.mxu0
        %v1139 = vadd.f32 0.0, %v1138
        %v1140 = vpop.f32.mrf.mxu0
        %1141 = vmatprep.mubr.f32.mxu0 0.0
        %1142 = vmatmul.mubr.f32.gmra.mxu0 %v832
        %v1143 = vpop.f32.mrf.mxu0
        %v1144 = vadd.f32 0.0, %v1143
        %v1145 = vpop.f32.mrf.mxu0
        %1146 = vmatprep.mubr.f32.mxu0 0.0
        %1147 = vmatmul.mubr.f32.gmra.mxu0 %v833
        %v1148 = vpop.f32.mrf.mxu0
        %v1149 = vadd.f32 0.0, %v1148
        %v1150 = vpop.f32.mrf.mxu0
        %1151 = vmatprep.mubr.f32.mxu0 0.0
        %1152 = vmatmul.mubr.f32.gmra.mxu0 %v834
        %v1153 = vpop.f32.mrf.mxu0
        %v1154 = vadd.f32 0.0, %v1153
        %v1155 = vpop.f32.mrf.mxu0
        %1156 = vmatprep.mubr.f32.mxu0 0.0
        %1157 = vmatmul.mubr.f32.gmra.mxu0 %v835
        %v1158 = vpop.f32.mrf.mxu0
        %v1159 = vadd.f32 0.0, %v1158
        %v1160 = vpop.f32.mrf.mxu0
        %1161 = vmatprep.mubr.f32.mxu0 0.0
        %1162 = vmatmul.mubr.f32.gmra.mxu0 %v836
        %v1163 = vpop.f32.mrf.mxu0
        %v1164 = vadd.f32 0.0, %v1163
        %v1165 = vpop.f32.mrf.mxu0
        %1166 = vmatprep.mubr.f32.mxu0 0.0
        %1167 = vmatmul.mubr.f32.gmra.mxu0 %v837
        %v1168 = vpop.f32.mrf.mxu0
        %v1169 = vadd.f32 0.0, %v1168
        %v1170 = vpop.f32.mrf.mxu0
        %1171 = vmatprep.mubr.f32.mxu0 0.0
        %1172 = vmatmul.mubr.f32.gmra.mxu0 %v838
        %v1173 = vpop.f32.mrf.mxu0
        %v1174 = vadd.f32 0.0, %v1173
        %v1175 = vpop.f32.mrf.mxu0
        %1176 = vmatprep.mubr.f32.mxu0 0.0
        %1177 = vmatmul.mubr.f32.gmra.mxu0 %v839
        %v1178 = vpop.f32.mrf.mxu0
        %v1179 = vadd.f32 0.0, %v1178
        %v1180 = vpop.f32.mrf.mxu0
        %1181 = vmatprep.mubr.f32.mxu0 0.0
        %1182 = vmatmul.mubr.f32.gmra.mxu0 %v840
        %v1183 = vpop.f32.mrf.mxu0
        %v1184 = vadd.f32 0.0, %v1183
        %v1185 = vpop.f32.mrf.mxu0
        %1186 = vmatprep.mubr.f32.mxu0 0.0
        %1187 = vmatmul.mubr.f32.gmra.mxu0 %v841
        %v1188 = vpop.f32.mrf.mxu0
        %v1189 = vadd.f32 0.0, %v1188
        %v1190 = vpop.f32.mrf.mxu0
        %1191 = vmatprep.mubr.f32.mxu0 0.0
        %1192 = vmatmul.mubr.f32.gmra.mxu0 %v842
        %v1193 = vpop.f32.mrf.mxu0
        %v1194 = vadd.f32 0.0, %v1193
        %v1195 = vpop.f32.mrf.mxu0
        %1196 = vdwg.mxu0
        %v1197 = vadd.f32 %v1036, %v1119
        %v1198 = vadd.f32 %v1037, %v1124
        %v1199 = vadd.f32 %v1038, %v1129
        %v1200 = vadd.f32 %v1039, %v1134
        %v1201 = vadd.f32 %v1040, %v1139
        %v1202 = vadd.f32 %v1041, %v1144
        %v1203 = vadd.f32 %v1042, %v1149
        %v1204 = vadd.f32 %v1043, %v1154
        %v1205 = vadd.f32 %v1044, %v1159
        %v1206 = vadd.f32 %v1045, %v1164
        %v1207 = vadd.f32 %v1046, %v1169
        %v1208 = vadd.f32 %v1047, %v1174
        %v1209 = vadd.f32 %v1048, %v1179
        %v1210 = vadd.f32 %v1049, %v1184
        %v1211 = vadd.f32 %v1050, %v1189
        %v1212 = vadd.f32 %v1051, %v1194
        %1213 = vst [vmem:[#allocation4] sm:$0xff] %v1197
        %1214 = vst [vmem:[#allocation4 + $0x8] sm:$0xff] %v1198
        %1215 = vst [vmem:[#allocation4 + $0x10] sm:$0xff] %v1199
        %1216 = vst [vmem:[#allocation4 + $0x18] sm:$0xff] %v1200
        %1217 = vst [vmem:[#allocation4 + $0x20] sm:$0xff] %v1201
        %1218 = vst [vmem:[#allocation4 + $0x28] sm:$0xff] %v1202
        %1219 = vst [vmem:[#allocation4 + $0x30] sm:$0xff] %v1203
        %1220 = vst [vmem:[#allocation4 + $0x38] sm:$0xff] %v1204
        %1221 = vst [vmem:[#allocation4 + $0x40] sm:$0xff] %v1205
        %1222 = vst [vmem:[#allocation4 + $0x48] sm:$0xff] %v1206
        %1223 = vst [vmem:[#allocation4 + $0x50] sm:$0xff] %v1207
        %1224 = vst [vmem:[#allocation4 + $0x58] sm:$0xff] %v1208
        %1225 = vst [vmem:[#allocation4 + $0x60] sm:$0xff] %v1209
        %1226 = vst [vmem:[#allocation4 + $0x68] sm:$0xff] %v1210
        %1227 = vst [vmem:[#allocation4 + $0x70] sm:$0xff] %v1211
        %1228 = vst [vmem:[#allocation4 + $0x78] sm:$0xff] %v1212
        %1229 = vst.msk [vmem:[#allocation2] sm:$0xff] %vm923, %v635
        %1230 = vst.msk [vmem:[#allocation2 + $0x8] sm:$0xff] %vm923, %v636
        %1231 = vst.msk [vmem:[#allocation2 + $0x10] sm:$0xff] %vm923, %v637
        %1232 = vst.msk [vmem:[#allocation2 + $0x18] sm:$0xff] %vm923, %v638
        %1233 = vst.msk [vmem:[#allocation2 + $0x20] sm:$0xff] %vm923, %v639
        %1234 = vst.msk [vmem:[#allocation2 + $0x28] sm:$0xff] %vm923, %v640
        %1235 = vst.msk [vmem:[#allocation2 + $0x30] sm:$0xff] %vm923, %v641
        %1236 = vst.msk [vmem:[#allocation2 + $0x38] sm:$0xff] %vm923, %v642
        %1237 = vst.msk [vmem:[#allocation2 + $0x40] sm:$0xff] %vm923, %v643
        %1238 = vst.msk [vmem:[#allocation2 + $0x48] sm:$0xff] %vm923, %v644
        %1239 = vst.msk [vmem:[#allocation2 + $0x50] sm:$0xff] %vm923, %v645
        %1240 = vst.msk [vmem:[#allocation2 + $0x58] sm:$0xff] %vm923, %v646
        %1241 = vst.msk [vmem:[#allocation2 + $0x60] sm:$0xff] %vm923, %v647
        %1242 = vst.msk [vmem:[#allocation2 + $0x68] sm:$0xff] %vm923, %v648
        %1243 = vst.msk [vmem:[#allocation2 + $0x70] sm:$0xff] %vm923, %v649
        %1244 = vst.msk [vmem:[#allocation2 + $0x78] sm:$0xff] %vm923, %v650
        // Predicated region
        $region49: #{tpu_custom_call.1} parent=31 // pred_check
          %p1245 = pneg %p303
        $region50: #{tpu_custom_call.1} parent=31 // pred_check_branch
          %1247 = sbr.rel (%p1245) target = $region52
        $region51: #{tpu_custom_call.1} parent=31 // pred_region
          %v1248 = vld [vmem:[#allocation3] sm:$0xff]
          %v1249 = vld [vmem:[#allocation3 + $0x8] sm:$0xff]
          %v1250 = vld [vmem:[#allocation3 + $0x10] sm:$0xff]
          %v1251 = vld [vmem:[#allocation3 + $0x18] sm:$0xff]
          %v1252 = vld [vmem:[#allocation3 + $0x20] sm:$0xff]
          %v1253 = vld [vmem:[#allocation3 + $0x28] sm:$0xff]
          %v1254 = vld [vmem:[#allocation3 + $0x30] sm:$0xff]
          %v1255 = vld [vmem:[#allocation3 + $0x38] sm:$0xff]
          %v1256 = vld [vmem:[#allocation3 + $0x40] sm:$0xff]
          %v1257 = vld [vmem:[#allocation3 + $0x48] sm:$0xff]
          %v1258 = vld [vmem:[#allocation3 + $0x50] sm:$0xff]
          %v1259 = vld [vmem:[#allocation3 + $0x58] sm:$0xff]
          %v1260 = vld [vmem:[#allocation3 + $0x60] sm:$0xff]
          %v1261 = vld [vmem:[#allocation3 + $0x68] sm:$0xff]
          %v1262 = vld [vmem:[#allocation3 + $0x70] sm:$0xff]
          %v1263 = vld [vmem:[#allocation3 + $0x78] sm:$0xff]
          %v1264 = vrcp.pop %v1248
          %v1265 = vrcp.pop %v1249
          %v1266 = vrcp.pop %v1250
          %v1267 = vrcp.pop %v1251
          %v1268 = vrcp.pop %v1252
          %v1269 = vrcp.pop %v1253
          %v1270 = vrcp.pop %v1254
          %v1271 = vrcp.pop %v1255
          %v1272 = vrcp.pop %v1256
          %v1273 = vrcp.pop %v1257
          %v1274 = vrcp.pop %v1258
          %v1275 = vrcp.pop %v1259
          %v1276 = vrcp.pop %v1260
          %v1277 = vrcp.pop %v1261
          %v1278 = vrcp.pop %v1262
          %v1279 = vrcp.pop %v1263
          %v1280 = vld [vmem:[#allocation4] sm:$0xff]
          %v1281 = vld [vmem:[#allocation4 + $0x8] sm:$0xff]
          %v1282 = vld [vmem:[#allocation4 + $0x10] sm:$0xff]
          %v1283 = vld [vmem:[#allocation4 + $0x18] sm:$0xff]
          %v1284 = vld [vmem:[#allocation4 + $0x20] sm:$0xff]
          %v1285 = vld [vmem:[#allocation4 + $0x28] sm:$0xff]
          %v1286 = vld [vmem:[#allocation4 + $0x30] sm:$0xff]
          %v1287 = vld [vmem:[#allocation4 + $0x38] sm:$0xff]
          %v1288 = vld [vmem:[#allocation4 + $0x40] sm:$0xff]
          %v1289 = vld [vmem:[#allocation4 + $0x48] sm:$0xff]
          %v1290 = vld [vmem:[#allocation4 + $0x50] sm:$0xff]
          %v1291 = vld [vmem:[#allocation4 + $0x58] sm:$0xff]
          %v1292 = vld [vmem:[#allocation4 + $0x60] sm:$0xff]
          %v1293 = vld [vmem:[#allocation4 + $0x68] sm:$0xff]
          %v1294 = vld [vmem:[#allocation4 + $0x70] sm:$0xff]
          %v1295 = vld [vmem:[#allocation4 + $0x78] sm:$0xff]
          %1297 = vset.pattern.permute.xlu0 0
          %1298 = vperm.xlu0 %1297, %v1264
          %v1299 = vpop.permute.xlu0 %1298
          %1302 = vset.pattern.permute.xlu0 0
          %1303 = vperm.xlu0 %1302, %v1265
          %v1304 = vpop.permute.xlu0 %1303
          %1307 = vset.pattern.permute.xlu0 0
          %1308 = vperm.xlu0 %1307, %v1266
          %v1309 = vpop.permute.xlu0 %1308
          %1312 = vset.pattern.permute.xlu0 0
          %1313 = vperm.xlu0 %1312, %v1267
          %v1314 = vpop.permute.xlu0 %1313
          %1317 = vset.pattern.permute.xlu0 0
          %1318 = vperm.xlu0 %1317, %v1268
          %v1319 = vpop.permute.xlu0 %1318
          %1322 = vset.pattern.permute.xlu0 0
          %1323 = vperm.xlu0 %1322, %v1269
          %v1324 = vpop.permute.xlu0 %1323
          %1327 = vset.pattern.permute.xlu0 0
          %1328 = vperm.xlu0 %1327, %v1270
          %v1329 = vpop.permute.xlu0 %1328
          %1332 = vset.pattern.permute.xlu0 0
          %1333 = vperm.xlu0 %1332, %v1271
          %v1334 = vpop.permute.xlu0 %1333
          %1337 = vset.pattern.permute.xlu0 0
          %1338 = vperm.xlu0 %1337, %v1272
          %v1339 = vpop.permute.xlu0 %1338
          %1342 = vset.pattern.permute.xlu0 0
          %1343 = vperm.xlu0 %1342, %v1273
          %v1344 = vpop.permute.xlu0 %1343
          %1347 = vset.pattern.permute.xlu0 0
          %1348 = vperm.xlu0 %1347, %v1274
          %v1349 = vpop.permute.xlu0 %1348
          %1352 = vset.pattern.permute.xlu0 0
          %1353 = vperm.xlu0 %1352, %v1275
          %v1354 = vpop.permute.xlu0 %1353
          %1357 = vset.pattern.permute.xlu0 0
          %1358 = vperm.xlu0 %1357, %v1276
          %v1359 = vpop.permute.xlu0 %1358
          %1362 = vset.pattern.permute.xlu0 0
          %1363 = vperm.xlu0 %1362, %v1277
          %v1364 = vpop.permute.xlu0 %1363
          %1367 = vset.pattern.permute.xlu0 0
          %1368 = vperm.xlu0 %1367, %v1278
          %v1369 = vpop.permute.xlu0 %1368
          %1372 = vset.pattern.permute.xlu0 0
          %1373 = vperm.xlu0 %1372, %v1279
          %v1374 = vpop.permute.xlu0 %1373
          %v1376 = vmul.f32 %v1280, %v1299
          %v1377 = vmul.f32 %v1281, %v1304
          %v1378 = vmul.f32 %v1282, %v1309
          %v1379 = vmul.f32 %v1283, %v1314
          %v1380 = vmul.f32 %v1284, %v1319
          %v1381 = vmul.f32 %v1285, %v1324
          %v1382 = vmul.f32 %v1286, %v1329
          %v1383 = vmul.f32 %v1287, %v1334
          %v1384 = vmul.f32 %v1288, %v1339
          %v1385 = vmul.f32 %v1289, %v1344
          %v1386 = vmul.f32 %v1290, %v1349
          %v1387 = vmul.f32 %v1291, %v1354
          %v1388 = vmul.f32 %v1292, %v1359
          %v1389 = vmul.f32 %v1293, %v1364
          %v1390 = vmul.f32 %v1294, %v1369
          %v1391 = vmul.f32 %v1295, %v1374
          %1392 = vst [vmem:[%s298] sm:$0xff] %v1376
          %1393 = vst [vmem:[%s298 + $0x8] sm:$0xff] %v1377
          %1394 = vst [vmem:[%s298 + $0x10] sm:$0xff] %v1378
          %1395 = vst [vmem:[%s298 + $0x18] sm:$0xff] %v1379
          %1396 = vst [vmem:[%s298 + $0x20] sm:$0xff] %v1380
          %1397 = vst [vmem:[%s298 + $0x28] sm:$0xff] %v1381
          %1398 = vst [vmem:[%s298 + $0x30] sm:$0xff] %v1382
          %1399 = vst [vmem:[%s298 + $0x38] sm:$0xff] %v1383
          %1400 = vst [vmem:[%s298 + $0x40] sm:$0xff] %v1384
          %1401 = vst [vmem:[%s298 + $0x48] sm:$0xff] %v1385
          %1402 = vst [vmem:[%s298 + $0x50] sm:$0xff] %v1386
          %1403 = vst [vmem:[%s298 + $0x58] sm:$0xff] %v1387
          %1404 = vst [vmem:[%s298 + $0x60] sm:$0xff] %v1388
          %1405 = vst [vmem:[%s298 + $0x68] sm:$0xff] %v1389
          %1406 = vst [vmem:[%s298 + $0x70] sm:$0xff] %v1390
          %1407 = vst [vmem:[%s298 + $0x78] sm:$0xff] %v1391
        $region52: #{tpu_custom_call.1} parent=31 // pred_fallthru
          _
        %s1408 = sand.u32 %s136, 1
        %s1409 = scalar_lea.sflag [#allocation7], %s1408
        %s1410 = sand.u32 %s136, 1
        %s1411 = smul.addr %s1410, 128
        %s1412 = scalar_lea.vmem [#allocation11], %s1411
        // Predicated region
        $region53: #{tpu_custom_call.1} parent=31 // pred_check
          %p1413 = pneg %p146
        $region54: #{tpu_custom_call.1} parent=31 // pred_check_branch
          %1415 = sbr.rel (%p1413) target = $region56
        $region55: #{tpu_custom_call.1} parent=31 // pred_region
          %s1416 = smul.u32 16, %s29
          %s1418 = ssub.s32 2048, 2048
          %1419 = vsyncadd %s1409, %s1418
          %s1420 = smul.addr %s28, 16
          %s1421 = sadd.s32 %s1416, %s1420
          %s1422 = smul.addr %s1421, 128
          %s1423 = scalar_lea.hbm %s3, %s1422
          %s1424 = sshll.u32 %s1412, 4
          %s1425 = int_to_ptr.vmem [resolvable:$true] %s1424
          %1430 = dma.vmem_to_hbm [thread:$0]  %s1425, 2048, %s1423, %s1409, 128, 128, 8
        $region56: #{tpu_custom_call.1} parent=31 // pred_fallthru
          _
      $region32: #{tpu_custom_call.1} parent=5 // pred_fallthru
        _
      %p1431 = scmp.le.s32.totalorder 2, %s18
      // Predicated region
      $region57: #{tpu_custom_call.1} parent=5 // pred_check
        %p1432 = pneg %p1431
      $region58: #{tpu_custom_call.1} parent=5 // pred_check_branch
        %1434 = sbr.rel (%p1432) target = $region60
      $region59: #{tpu_custom_call.1} parent=5 // pred_region
        %s1435 = ssub.s32 %s18, 2
        // Predicated region
        $region61: #{tpu_custom_call.1} parent=59 // pred_check
          %p1436 = pneg %p152
        $region62: #{tpu_custom_call.1} parent=59 // pred_check_branch
          %1438 = sbr.rel (%p1436) target = $region64
        $region63: #{tpu_custom_call.1} parent=59 // pred_region
          %s1439 = sand.u32 %s137, 1
          %s1440 = scalar_lea.sflag [#allocation7], %s1439
          %s1441 = sand.u32 %s137, 1
          %s1442 = smul.addr %s1441, 128
          %s1443 = scalar_lea.vmem [#allocation11], %s1442
          %1444 = dma.done %s1440, 2048
        $region64: #{tpu_custom_call.1} parent=59 // pred_fallthru
          _
      $region60: #{tpu_custom_call.1} parent=5 // pred_fallthru
        _
    $region6: #{tpu_custom_call.1} parent=1 // loop_footer
      %s22 = sadd.s32 1, %s18
    $region7: #{tpu_custom_call.1} parent=1 // loop_footer_branch
      %17 = sbr.rel target = $region3
    $region8: #{tpu_custom_call.1} parent=1 // loop_exit
      _
    %1445 = vsyncpa [#allocation6], 1
    %s1446 = scalar_lea.sflag [#allocation6], 1
    %1447 = vsyncpa %s1446, 1
    %1448 = vsyncpa [#allocation9], 1
    %s1449 = scalar_lea.sflag [#allocation9], 1
    %1450 = vsyncpa %s1449, 1
    %1451 = vsyncpa [#allocation7], 1
    %s1452 = scalar_lea.sflag [#allocation7], 1
    %1453 = vsyncpa %s1452, 1

</llo_original>
